<compile_context>
chip_gen: v7x
topology: tpu7x:2x2x1
jax: 0.10.0
libtpu: 0.0.40
codegen_flags: <defaults>
</compile_context>

<pallas_src>
import functools
import math

import jax
import jax.numpy as jnp
from jax.experimental import pallas as pl
from jax.experimental.pallas import tpu as pltpu

LANE = 128


def _round_up(v, m):
    return ((v + m - 1) // m) * m


def _pad2(x, rows, cols, dtype=None):
    out = jnp.pad(x, ((0, rows - x.shape[0]), (0, cols - x.shape[1])))
    return out.astype(dtype) if dtype is not None else out


# ----------------------------------------------------------------------------
# Glue: edge_index -> dense normalized adjacency (PyG gcn_norm semantics)
# ----------------------------------------------------------------------------
def build_norm_adj(edge_index, num_nodes):
    src = edge_index[0]
    dst = edge_index[1]
    a = jnp.zeros((num_nodes, num_nodes), dtype=jnp.float32)
    # message flows src -> dst => A[dst, src]; duplicates ACCUMULATE (scatter-add)
    a = a.at[dst, src].add(1.0)
    # add *remaining* self loops (existing self loops keep their weight)
    diag = jnp.diagonal(a)
    a = a + jnp.diag(jnp.where(diag == 0.0, 1.0, 0.0))
    deg = a.sum(axis=1)
    d_inv_sqrt = jnp.where(deg > 0.0, jax.lax.rsqrt(deg), 0.0)
    return d_inv_sqrt[:, None] * a * d_inv_sqrt[None, :]


# ----------------------------------------------------------------------------
# Kernel 1: fully fused 4-layer GCN autoencoder (A_norm resident in VMEM).
# ----------------------------------------------------------------------------
def _gcn_fused_kernel(a_ref, x_ref, w1, b1, w2, b2, w3, b3, w4, b4,
                      xrec_ref, z_ref, *, aggregate_first):
    a = a_ref[...]  # (Np, Np) bf16, loaded once, reused by all four layers

    def layer(h_in, w_ref, b_ref, relu, agg_first):
        if agg_first:  # (A @ X) @ W  -- A multiplies the narrower operand
            agg = jnp.dot(a, h_in, preferred_element_type=jnp.float32)
            out = jnp.dot(agg.astype(w_ref.dtype), w_ref[...],
                          preferred_element_type=jnp.float32)
        else:          # A @ (X @ W)
            h = jnp.dot(h_in, w_ref[...], preferred_element_type=jnp.float32)
            out = jnp.dot(a, h.astype(a.dtype),
                          preferred_element_type=jnp.float32)
        out = out + b_ref[...]
        if relu:
            out = jnp.maximum(out, 0.0)
        return out

    # encode
    h1 = layer(x_ref[...], w1, b1, True, aggregate_first[0]).astype(a.dtype)
    # dropout(0.2): identity at inference
    z = layer(h1, w2, b2, False, aggregate_first[1])
    # decode
    h3 = layer(z.astype(a.dtype), w3, b3, True, aggregate_first[2]).astype(a.dtype)
    # dropout(0.2): identity at inference
    xr = layer(h3, w4, b4, False, aggregate_first[3])

    z_ref[...] = z.astype(z_ref.dtype)
    xrec_ref[...] = xr.astype(xrec_ref.dtype)


# ----------------------------------------------------------------------------
# Kernel 2: one tiled/gridded GCN layer.
#   grid = (row blocks ["parallel"], K blocks of A ["arbitrary"])
#   f32 accumulator scratch, pl.when init / finalize on the K axis.
# ----------------------------------------------------------------------------
def _gcn_tiled_kernel(a_ref, x_ref, w_ref, b_ref, o_ref, acc_ref, *,
                      apply_relu, aggregate_first):
    k = pl.program_id(1)

    @pl.when(k == 0)
    def _():
        acc_ref[...] = jnp.zeros_like(acc_ref)

    if aggregate_first:
        # accumulate A_block @ X_block (narrow feature width), transform at end
        acc_ref[...] += jnp.dot(a_ref[...], x_ref[...],
                                preferred_element_type=jnp.float32)
    else:
        # transform this K-block of nodes, then aggregate
        h = jnp.dot(x_ref[...], w_ref[...], preferred_element_type=jnp.float32)
        acc_ref[...] += jnp.dot(a_ref[...], h.astype(a_ref.dtype),
                                preferred_element_type=jnp.float32)

    @pl.when(k == pl.num_programs(1) - 1)
    def _():
        if aggregate_first:
            out = jnp.dot(acc_ref[...].astype(w_ref.dtype), w_ref[...],
                          preferred_element_type=jnp.float32) + b_ref[...]
        else:
            out = acc_ref[...] + b_ref[...]
        if apply_relu:
            out = jnp.maximum(out, 0.0)
        o_ref[...] = out.astype(o_ref.dtype)


def gcn_layer_tiled(a_p, x_p, w_p, b_p, *, apply_relu, out_dtype, tr, tk):
    """One GCN layer on padded bf16 inputs, tiled over (rows, K)."""
    np_, fin_p = x_p.shape
    fout_p = w_p.shape[1]
    aggregate_first = w_p.shape[0] <= fout_p        # padded widths
    acc_w = fin_p if aggregate_first else fout_p
    grid = (np_ // tr, np_ // tk)

    # Explicit VMEM budget for the chosen tiles (double-buffered operands).
    out_sz = jnp.dtype(out_dtype).itemsize
    need = (2 * tr * tk * 2 + 2 * tk * fin_p * 2 + 2 * w_p.shape[0] * fout_p * 2
            + 2 * fout_p * 4 + 2 * tr * fout_p * out_sz + tr * acc_w * 4)
    vmem_limit = min(max(int(need * 2), 16 * 1024 * 1024), 64 * 1024 * 1024)

    kernel = functools.partial(_gcn_tiled_kernel, apply_relu=apply_relu,
                               aggregate_first=aggregate_first)
    return pl.pallas_call(
        kernel,
        out_shape=jax.ShapeDtypeStruct((np_, fout_p), out_dtype),
        grid_spec=pltpu.PrefetchScalarGridSpec(
            num_scalar_prefetch=0,
            grid=grid,
            in_specs=[
                pl.BlockSpec((tr, tk), lambda r, k: (r, k)),          # A block
                pl.BlockSpec((tk, fin_p), lambda r, k: (k, 0)),        # X rows
                pl.BlockSpec((w_p.shape[0], fout_p), lambda r, k: (0, 0)),  # W
                pl.BlockSpec((1, fout_p), lambda r, k: (0, 0)),        # bias
            ],
            out_specs=pl.BlockSpec((tr, fout_p), lambda r, k: (r, 0)),
            scratch_shapes=[pltpu.VMEM((tr, acc_w), jnp.float32)],
        ),
        compiler_params=pltpu.CompilerParams(
            dimension_semantics=("parallel", "arbitrary"),
            vmem_limit_bytes=vmem_limit,
        ),
    )(a_p, x_p, w_p, b_p)


# ----------------------------------------------------------------------------
# Parameters (deterministic, Glorot-uniform weights / zero bias like PyG)
# ----------------------------------------------------------------------------
def init_params(key, input_dim, hidden_dim=64, latent_dim=32):
    dims = [
        (input_dim, hidden_dim),   # conv1
        (hidden_dim, latent_dim),  # conv2
        (latent_dim, hidden_dim),  # conv3
        (hidden_dim, input_dim),   # conv4
    ]
    params = []
    for d_in, d_out in dims:
        key, sub = jax.random.split(key)
        limit = (6.0 / (d_in + d_out)) ** 0.5
        w = jax.random.uniform(sub, (d_in, d_out), jnp.float32, -limit, limit)
        b = jnp.zeros((d_out,), jnp.float32)
        params.append((w, b))
    return params


# ----------------------------------------------------------------------------
# Forward pass: encode -> decode, returns (x_reconstructed, z)
# ----------------------------------------------------------------------------
def gnn_autoencoder_forward(params, x, edge_index, *, mode="auto",
                            tile_r=512, tile_k=512):
    n, input_dim = x.shape
    latent_dim = params[1][0].shape[1]
    a = build_norm_adj(edge_index, n)

    # Common lane-dense padded feature width for all layers.
    all_dims = [input_dim] + [w.shape[1] for (w, _) in params]
    fp = _round_up(max(all_dims), LANE)

    # Pad + cast parameters once: bf16 weights (MXU rate), f32 biases.
    wp = [_pad2(w, fp, fp, jnp.bfloat16) for (w, _) in params]
    bp = [jnp.pad(b, (0, fp - b.shape[0])).reshape(1, fp).astype(jnp.float32)
          for (_, b) in params]

    # Resident-in-VMEM footprint estimate for the fused path.
    np_f = _round_up(n, LANE)
    fused_need = (2 * np_f * np_f * 2       # A_norm (bf16)
                  + 2 * np_f * fp * 2       # X (bf16)
                  + 4 * np_f * fp * 4       # two f32 outputs
                  + 8 * np_f * fp * 4       # intermediate activations
                  + 8 * fp * fp * 2 + 8 * fp * 4)

    if mode == "auto":
        mode = "fused" if fused_need <= 40 * 1024 * 1024 else "tiled"

    if mode == "fused":
        a_p = _pad2(a, np_f, np_f, jnp.bfloat16)
        x_p = _pad2(x, np_f, fp, jnp.bfloat16)
        agg_flags = tuple(w.shape[0] <= w.shape[1] for w in wp)
        vmem_limit = min(max(int(fused_need * 1.3), 16 * 1024 * 1024),
                         64 * 1024 * 1024)
        vmem = pl.BlockSpec(memory_space=pltpu.MemorySpace.VMEM)
        kernel = functools.partial(_gcn_fused_kernel, aggregate_first=agg_flags)
        x_rec_p, z_p = pl.pallas_call(
            kernel,
            out_shape=(jax.ShapeDtypeStruct((np_f, fp), jnp.float32),
                       jax.ShapeDtypeStruct((np_f, fp), jnp.float32)),
            in_specs=[vmem] * 10,
            out_specs=(vmem, vmem),
            compiler_params=pltpu.CompilerParams(vmem_limit_bytes=vmem_limit),
        )(a_p, x_p, wp[0], bp[0], wp[1], bp[1], wp[2], bp[2], wp[3], bp[3])
        return x_rec_p[:n, :input_dim], z_p[:n, :latent_dim]

    # --- tiled / gridded per-layer path (arbitrary N) ---
    np_t = _round_up(n, math.lcm(tile_r, tile_k))
    a_p = _pad2(a, np_t, np_t, jnp.bfloat16)
    x_p = _pad2(x, np_t, fp, jnp.bfloat16)

    # encode
    h1 = gcn_layer_tiled(a_p, x_p, wp[0], bp[0], apply_relu=True,
                         out_dtype=jnp.bfloat16, tr=tile_r, tk=tile_k)
    # dropout(0.2): identity at inference
    z_p = gcn_layer_tiled(a_p, h1, wp[1], bp[1], apply_relu=False,
                          out_dtype=jnp.float32, tr=tile_r, tk=tile_k)
    # decode
    h3 = gcn_layer_tiled(a_p, z_p.astype(jnp.bfloat16), wp[2], bp[2],
                         apply_relu=True, out_dtype=jnp.bfloat16,
                         tr=tile_r, tk=tile_k)
    # dropout(0.2): identity at inference
    x_rec_p = gcn_layer_tiled(a_p, h3, wp[3], bp[3], apply_relu=False,
                              out_dtype=jnp.float32, tr=tile_r, tk=tile_k)

    return x_rec_p[:n, :input_dim], z_p[:n, :latent_dim]


# ----------------------------------------------------------------------------
# Demo / self-test
# ----------------------------------------------------------------------------
if __name__ == "__main__":
    INPUT_DIM = 16
    HIDDEN_DIM = 64
    LATENT_DIM = 32

    key = jax.random.PRNGKey(0)
    key, pkey = jax.random.split(key)
    params = init_params(pkey, INPUT_DIM, HIDDEN_DIM, LATENT_DIM)

    def ring_graph(n):
        idx = jnp.arange(n, dtype=jnp.int32)
        nxt = (idx + 1) % n
        return jnp.stack([jnp.concatenate([idx, nxt]),
                          jnp.concatenate([nxt, idx])], axis=0)

    def reference_forward(p, x, edge_index):
        a = build_norm_adj(edge_index, x.shape[0])
        (w1, b1), (w2, b2), (w3, b3), (w4, b4) = p
        h = jax.nn.relu(a @ (x @ w1) + b1)
        z = a @ (h @ w2) + b2
        h = jax.nn.relu(a @ (z @ w3) + b3)
        xr = a @ (h @ w4) + b4
        return xr, z

    # 1) Small graph -> fused single-kernel path (A_norm read once from HBM).
    n_small = 16
    key, xk = jax.random.split(key)
    x_small = jax.random.normal(xk, (n_small, INPUT_DIM), dtype=jnp.float32)
    ei_small = ring_graph(n_small)
    fwd_fused = jax.jit(functools.partial(gnn_autoencoder_forward, mode="fused"))
    xr_f, z_f = fwd_fused(params, x_small, ei_small)
    jax.block_until_ready((xr_f, z_f))
    xr_ref, z_ref = reference_forward(params, x_small, ei_small)
    assert xr_f.shape == (n_small, INPUT_DIM) and z_f.shape == (n_small, LATENT_DIM)
    assert jnp.allclose(xr_f, xr_ref, atol=5e-2, rtol=5e-2)
    assert jnp.allclose(z_f, z_ref, atol=5e-2, rtol=5e-2)

    # 2) Larger graph -> tiled/gridded path (grid (2, 2) with 512x512 A tiles).
    n_big = 1024
    key, xk2 = jax.random.split(key)
    x_big = jax.random.normal(xk2, (n_big, INPUT_DIM), dtype=jnp.float32)
    ei_big = ring_graph(n_big)
    fwd_tiled = jax.jit(functools.partial(gnn_autoencoder_forward, mode="tiled"))
    xr_t, z_t = fwd_tiled(params, x_big, ei_big)
    jax.block_until_ready((xr_t, z_t))
    xr_ref2, z_ref2 = reference_forward(params, x_big, ei_big)
    assert xr_t.shape == (n_big, INPUT_DIM) and z_t.shape == (n_big, LATENT_DIM)
    assert jnp.allclose(xr_t, xr_ref2, atol=5e-2, rtol=5e-2)
    assert jnp.allclose(z_t, z_ref2, atol=5e-2, rtol=5e-2)

    print("KERNEL_OK")
</pallas_src>

<mosaic_0001>
module attributes {stable_mosaic.version = 11 : i64} {
  func.func private @main(%arg0: i32) attributes {dimension_semantics = [#tpu.dimension_semantics<core_parallel>], iteration_bounds = array<i64: 2>, tpu.core_type = #tpu.core_type<sc_scalar_subcore>, window_params = []} {
    return
  }
}

module attributes {stable_mosaic.version = 11 : i64} {
  func.func private @main(%arg0: i32) attributes {dimension_semantics = [#tpu.dimension_semantics<core_parallel>], iteration_bounds = array<i64: 2>, tpu.core_type = #tpu.core_type<sc_scalar_subcore>, window_params = []} {
    return
  }
}

module attributes {stable_mosaic.version = 11 : i64} {
  func.func @_gcn_fused_kernel(%arg0: memref<128x128xbf16, #tpu.memory_space<vmem>>, %arg1: memref<128x128xbf16, #tpu.memory_space<vmem>>, %arg2: memref<128x128xbf16, #tpu.memory_space<vmem>>, %arg3: memref<1x128xf32, #tpu.memory_space<vmem>>, %arg4: memref<128x128xbf16, #tpu.memory_space<vmem>>, %arg5: memref<1x128xf32, #tpu.memory_space<vmem>>, %arg6: memref<128x128xbf16, #tpu.memory_space<vmem>>, %arg7: memref<1x128xf32, #tpu.memory_space<vmem>>, %arg8: memref<128x128xbf16, #tpu.memory_space<vmem>>, %arg9: memref<1x128xf32, #tpu.memory_space<vmem>>, %arg10: memref<128x128xf32, #tpu.memory_space<vmem>>, %arg11: memref<128x128xf32, #tpu.memory_space<vmem>>) attributes {dimension_semantics = [], scalar_prefetch = 0 : i64, scratch_operands = 0 : i64, tpu.core_type = #tpu.core_type<tc>} {
    %c0 = arith.constant 0 : index
    %c0_0 = arith.constant 0 : index
    %0 = vector.load %arg0[%c0, %c0_0] : memref<128x128xbf16, #tpu.memory_space<vmem>>, vector<128x128xbf16>
    %c0_1 = arith.constant 0 : index
    %c0_2 = arith.constant 0 : index
    %1 = vector.load %arg1[%c0_1, %c0_2] : memref<128x128xbf16, #tpu.memory_space<vmem>>, vector<128x128xbf16>
    %cst = arith.constant dense<0.000000e+00> : vector<128x128xf32>
    %2 = tpu.matmul %0, %1, %cst {dimension_numbers = #tpu.dot_dimension_numbers<[1], [0], [0], [1], [0, 0, 1, 1], [], []>} : vector<128x128xbf16>, vector<128x128xbf16>, vector<128x128xf32> -> vector<128x128xf32>
    %3 = arith.truncf %2 : vector<128x128xf32> to vector<128x128xbf16>
    %c0_3 = arith.constant 0 : index
    %c0_4 = arith.constant 0 : index
    %4 = vector.load %arg2[%c0_3, %c0_4] : memref<128x128xbf16, #tpu.memory_space<vmem>>, vector<128x128xbf16>
    %cst_5 = arith.constant dense<0.000000e+00> : vector<128x128xf32>
    %5 = tpu.matmul %3, %4, %cst_5 {dimension_numbers = #tpu.dot_dimension_numbers<[1], [0], [0], [1], [0, 0, 1, 1], [], []>} : vector<128x128xbf16>, vector<128x128xbf16>, vector<128x128xf32> -> vector<128x128xf32>
    %c0_6 = arith.constant 0 : index
    %c0_7 = arith.constant 0 : index
    %6 = vector.load %arg3[%c0_6, %c0_7] : memref<1x128xf32, #tpu.memory_space<vmem>>, vector<1x128xf32>
    %7 = vector.broadcast %6 : vector<1x128xf32> to vector<128x128xf32>
    %8 = arith.addf %5, %7 : vector<128x128xf32>
    %cst_8 = arith.constant 0.000000e+00 : f32
    %9 = vector.broadcast %cst_8 : f32 to vector<128x128xf32>
    %10 = arith.maximumf %8, %9 : vector<128x128xf32>
    %11 = arith.truncf %10 : vector<128x128xf32> to vector<128x128xbf16>
    %cst_9 = arith.constant dense<0.000000e+00> : vector<128x128xf32>
    %12 = tpu.matmul %0, %11, %cst_9 {dimension_numbers = #tpu.dot_dimension_numbers<[1], [0], [0], [1], [0, 0, 1, 1], [], []>} : vector<128x128xbf16>, vector<128x128xbf16>, vector<128x128xf32> -> vector<128x128xf32>
    %13 = arith.truncf %12 : vector<128x128xf32> to vector<128x128xbf16>
    %c0_10 = arith.constant 0 : index
    %c0_11 = arith.constant 0 : index
    %14 = vector.load %arg4[%c0_10, %c0_11] : memref<128x128xbf16, #tpu.memory_space<vmem>>, vector<128x128xbf16>
    %cst_12 = arith.constant dense<0.000000e+00> : vector<128x128xf32>
    %15 = tpu.matmul %13, %14, %cst_12 {dimension_numbers = #tpu.dot_dimension_numbers<[1], [0], [0], [1], [0, 0, 1, 1], [], []>} : vector<128x128xbf16>, vector<128x128xbf16>, vector<128x128xf32> -> vector<128x128xf32>
    %c0_13 = arith.constant 0 : index
    %c0_14 = arith.constant 0 : index
    %16 = vector.load %arg5[%c0_13, %c0_14] : memref<1x128xf32, #tpu.memory_space<vmem>>, vector<1x128xf32>
    %17 = vector.broadcast %16 : vector<1x128xf32> to vector<128x128xf32>
    %18 = arith.addf %15, %17 : vector<128x128xf32>
    %19 = arith.truncf %18 : vector<128x128xf32> to vector<128x128xbf16>
    %cst_15 = arith.constant dense<0.000000e+00> : vector<128x128xf32>
    %20 = tpu.matmul %0, %19, %cst_15 {dimension_numbers = #tpu.dot_dimension_numbers<[1], [0], [0], [1], [0, 0, 1, 1], [], []>} : vector<128x128xbf16>, vector<128x128xbf16>, vector<128x128xf32> -> vector<128x128xf32>
    %21 = arith.truncf %20 : vector<128x128xf32> to vector<128x128xbf16>
    %c0_16 = arith.constant 0 : index
    %c0_17 = arith.constant 0 : index
    %22 = vector.load %arg6[%c0_16, %c0_17] : memref<128x128xbf16, #tpu.memory_space<vmem>>, vector<128x128xbf16>
    %cst_18 = arith.constant dense<0.000000e+00> : vector<128x128xf32>
    %23 = tpu.matmul %21, %22, %cst_18 {dimension_numbers = #tpu.dot_dimension_numbers<[1], [0], [0], [1], [0, 0, 1, 1], [], []>} : vector<128x128xbf16>, vector<128x128xbf16>, vector<128x128xf32> -> vector<128x128xf32>
    %c0_19 = arith.constant 0 : index
    %c0_20 = arith.constant 0 : index
    %24 = vector.load %arg7[%c0_19, %c0_20] : memref<1x128xf32, #tpu.memory_space<vmem>>, vector<1x128xf32>
    %25 = vector.broadcast %24 : vector<1x128xf32> to vector<128x128xf32>
    %26 = arith.addf %23, %25 : vector<128x128xf32>
    %cst_21 = arith.constant 0.000000e+00 : f32
    %27 = vector.broadcast %cst_21 : f32 to vector<128x128xf32>
    %28 = arith.maximumf %26, %27 : vector<128x128xf32>
    %29 = arith.truncf %28 : vector<128x128xf32> to vector<128x128xbf16>
    %cst_22 = arith.constant dense<0.000000e+00> : vector<128x128xf32>
    %30 = tpu.matmul %0, %29, %cst_22 {dimension_numbers = #tpu.dot_dimension_numbers<[1], [0], [0], [1], [0, 0, 1, 1], [], []>} : vector<128x128xbf16>, vector<128x128xbf16>, vector<128x128xf32> -> vector<128x128xf32>
    %31 = arith.truncf %30 : vector<128x128xf32> to vector<128x128xbf16>
    %c0_23 = arith.constant 0 : index
    %c0_24 = arith.constant 0 : index
    %32 = vector.load %arg8[%c0_23, %c0_24] : memref<128x128xbf16, #tpu.memory_space<vmem>>, vector<128x128xbf16>
    %cst_25 = arith.constant dense<0.000000e+00> : vector<128x128xf32>
    %33 = tpu.matmul %31, %32, %cst_25 {dimension_numbers = #tpu.dot_dimension_numbers<[1], [0], [0], [1], [0, 0, 1, 1], [], []>} : vector<128x128xbf16>, vector<128x128xbf16>, vector<128x128xf32> -> vector<128x128xf32>
    %c0_26 = arith.constant 0 : index
    %c0_27 = arith.constant 0 : index
    %34 = vector.load %arg9[%c0_26, %c0_27] : memref<1x128xf32, #tpu.memory_space<vmem>>, vector<1x128xf32>
    %35 = vector.broadcast %34 : vector<1x128xf32> to vector<128x128xf32>
    %36 = arith.addf %33, %35 : vector<128x128xf32>
    %c0_28 = arith.constant 0 : index
    %c0_29 = arith.constant 0 : index
    %37 = vector.load %arg11[%c0_28, %c0_29] : memref<128x128xf32, #tpu.memory_space<vmem>>, vector<128x128xf32>
    tpu.vector_store %arg11[%c0_28, %c0_29], %18 {strides = array<i32>} : memref<128x128xf32, #tpu.memory_space<vmem>>, vector<128x128xf32>,
    %c0_30 = arith.constant 0 : index
    %c0_31 = arith.constant 0 : index
    %38 = vector.load %arg10[%c0_30, %c0_31] : memref<128x128xf32, #tpu.memory_space<vmem>>, vector<128x128xf32>
    tpu.vector_store %arg10[%c0_30, %c0_31], %36 {strides = array<i32>} : memref<128x128xf32, #tpu.memory_space<vmem>>, vector<128x128xf32>,
    return
  }
}

</mosaic_0001>

<llo_original>
// kernel: gnn_autoencoder_forward.1
$region0: #{gnn_autoencoder_forward.1}
  #allocation0 [shape = 'u32[]', space=smem, size = 0x4, offset = 0x4, fixed_abs, tag = 'smem constant byte address 0x4 - core index']
  #allocation1 [shape = 'u32[144,128]{1,0:T(1,128)}', space=vmem, size = 0x12000, scoped, tag = 'internal scratch']
  %s0 = inlined_call_operand.vmem [shape: bf16[128,128], index: 0, kind: input, shape index: {}]
  %s1 = inlined_call_operand.vmem [shape: bf16[128,128], index: 1, kind: input, shape index: {}]
  %s2 = inlined_call_operand.vmem [shape: bf16[128,128], index: 2, kind: input, shape index: {}]
  %s3 = inlined_call_operand.vmem [shape: f32[1,128], index: 3, kind: input, shape index: {}]
  %s4 = inlined_call_operand.vmem [shape: bf16[128,128], index: 4, kind: input, shape index: {}]
  %s5 = inlined_call_operand.vmem [shape: f32[1,128], index: 5, kind: input, shape index: {}]
  %s6 = inlined_call_operand.vmem [shape: bf16[128,128], index: 6, kind: input, shape index: {}]
  %s7 = inlined_call_operand.vmem [shape: f32[1,128], index: 7, kind: input, shape index: {}]
  %s8 = inlined_call_operand.vmem [shape: bf16[128,128], index: 8, kind: input, shape index: {}]
  %s9 = inlined_call_operand.vmem [shape: f32[1,128], index: 9, kind: input, shape index: {}]
  %s10 = inlined_call_operand.vmem [shape: f32[128,128], index: 10, kind: output, shape index: {0}]
  %s11 = inlined_call_operand.vmem [shape: f32[128,128], index: 11, kind: output, shape index: {1}]
  %12 = xla_tuple %s10, %s11
  %s13 = sld [smem:[#allocation0]]
  $region58: #{gnn_autoencoder_forward.1} parent=0
    _
  %s15 = ssub.s32 1, %s13
  %s16 = scalar_select 0, %s15, %s13
  // Predicated region
  $region2: #{gnn_autoencoder_forward.1} parent=0 // pred_check
    _
  $region3: #{gnn_autoencoder_forward.1} parent=0 // pred_check_branch
    %18 = sbr.rel (0) target = $region5
  $region4: #{gnn_autoencoder_forward.1} parent=0 // pred_region
    _
  $region5: #{gnn_autoencoder_forward.1} parent=0 // pred_fallthru
    _
  // Predicated region
  $region6: #{gnn_autoencoder_forward.1} parent=0 // pred_check
    _
  $region7: #{gnn_autoencoder_forward.1} parent=0 // pred_check_branch
    %20 = sbr.rel (0) target = $region9
  $region8: #{gnn_autoencoder_forward.1} parent=0 // pred_region
    _
  $region9: #{gnn_autoencoder_forward.1} parent=0 // pred_fallthru
    _
  // Predicated region
  $region10: #{gnn_autoencoder_forward.1} parent=0 // pred_check
    _
  $region11: #{gnn_autoencoder_forward.1} parent=0 // pred_check_branch
    %22 = sbr.rel (0) target = $region13
  $region12: #{gnn_autoencoder_forward.1} parent=0 // pred_region
    _
  $region13: #{gnn_autoencoder_forward.1} parent=0 // pred_fallthru
    _
  // Predicated region
  $region14: #{gnn_autoencoder_forward.1} parent=0 // pred_check
    _
  $region15: #{gnn_autoencoder_forward.1} parent=0 // pred_check_branch
    %24 = sbr.rel (0) target = $region17
  $region16: #{gnn_autoencoder_forward.1} parent=0 // pred_region
    _
  $region17: #{gnn_autoencoder_forward.1} parent=0 // pred_fallthru
    _
  // Predicated region
  $region18: #{gnn_autoencoder_forward.1} parent=0 // pred_check
    _
  $region19: #{gnn_autoencoder_forward.1} parent=0 // pred_check_branch
    %26 = sbr.rel (0) target = $region21
  $region20: #{gnn_autoencoder_forward.1} parent=0 // pred_region
    _
  $region21: #{gnn_autoencoder_forward.1} parent=0 // pred_fallthru
    _
  // Predicated region
  $region22: #{gnn_autoencoder_forward.1} parent=0 // pred_check
    _
  $region23: #{gnn_autoencoder_forward.1} parent=0 // pred_check_branch
    %28 = sbr.rel (0) target = $region25
  $region24: #{gnn_autoencoder_forward.1} parent=0 // pred_region
    _
  $region25: #{gnn_autoencoder_forward.1} parent=0 // pred_fallthru
    _
  // Predicated region
  $region26: #{gnn_autoencoder_forward.1} parent=0 // pred_check
    _
  $region27: #{gnn_autoencoder_forward.1} parent=0 // pred_check_branch
    %30 = sbr.rel (0) target = $region29
  $region28: #{gnn_autoencoder_forward.1} parent=0 // pred_region
    _
  $region29: #{gnn_autoencoder_forward.1} parent=0 // pred_fallthru
    _
  // Predicated region
  $region30: #{gnn_autoencoder_forward.1} parent=0 // pred_check
    _
  $region31: #{gnn_autoencoder_forward.1} parent=0 // pred_check_branch
    %32 = sbr.rel (0) target = $region33
  $region32: #{gnn_autoencoder_forward.1} parent=0 // pred_region
    _
  $region33: #{gnn_autoencoder_forward.1} parent=0 // pred_fallthru
    _
  // Predicated region
  $region34: #{gnn_autoencoder_forward.1} parent=0 // pred_check
    _
  $region35: #{gnn_autoencoder_forward.1} parent=0 // pred_check_branch
    %34 = sbr.rel (0) target = $region37
  $region36: #{gnn_autoencoder_forward.1} parent=0 // pred_region
    _
  $region37: #{gnn_autoencoder_forward.1} parent=0 // pred_fallthru
    _
  // Predicated region
  $region38: #{gnn_autoencoder_forward.1} parent=0 // pred_check
    _
  $region39: #{gnn_autoencoder_forward.1} parent=0 // pred_check_branch
    %36 = sbr.rel (0) target = $region41
  $region40: #{gnn_autoencoder_forward.1} parent=0 // pred_region
    _
  $region41: #{gnn_autoencoder_forward.1} parent=0 // pred_fallthru
    _
  %v38 = vld [vmem:[%s0] sm:$0xf]
  %v39 = vld [vmem:[%s0 + $0x4] sm:$0xf]
  %v40 = vld [vmem:[%s0 + $0x8] sm:$0xf]
  %v41 = vld [vmem:[%s0 + $0xc] sm:$0xf]
  %v42 = vld [vmem:[%s0 + $0x10] sm:$0xf]
  %v43 = vld [vmem:[%s0 + $0x14] sm:$0xf]
  %v44 = vld [vmem:[%s0 + $0x18] sm:$0xf]
  %v45 = vld [vmem:[%s0 + $0x1c] sm:$0xf]
  %v46 = vld [vmem:[%s0 + $0x20] sm:$0xf]
  %v47 = vld [vmem:[%s0 + $0x24] sm:$0xf]
  %v48 = vld [vmem:[%s0 + $0x28] sm:$0xf]
  %v49 = vld [vmem:[%s0 + $0x2c] sm:$0xf]
  %v50 = vld [vmem:[%s0 + $0x30] sm:$0xf]
  %v51 = vld [vmem:[%s0 + $0x34] sm:$0xf]
  %v52 = vld [vmem:[%s0 + $0x38] sm:$0xf]
  %v53 = vld [vmem:[%s0 + $0x3c] sm:$0xf]
  %v54 = vld [vmem:[%s1] sm:$0xf]
  %v55 = vld [vmem:[%s1 + $0x4] sm:$0xf]
  %v56 = vld [vmem:[%s1 + $0x8] sm:$0xf]
  %v57 = vld [vmem:[%s1 + $0xc] sm:$0xf]
  %v58 = vld [vmem:[%s1 + $0x10] sm:$0xf]
  %v59 = vld [vmem:[%s1 + $0x14] sm:$0xf]
  %v60 = vld [vmem:[%s1 + $0x18] sm:$0xf]
  %v61 = vld [vmem:[%s1 + $0x1c] sm:$0xf]
  %v62 = vld [vmem:[%s1 + $0x20] sm:$0xf]
  %v63 = vld [vmem:[%s1 + $0x24] sm:$0xf]
  %v64 = vld [vmem:[%s1 + $0x28] sm:$0xf]
  %v65 = vld [vmem:[%s1 + $0x2c] sm:$0xf]
  %v66 = vld [vmem:[%s1 + $0x30] sm:$0xf]
  %v67 = vld [vmem:[%s1 + $0x34] sm:$0xf]
  %v68 = vld [vmem:[%s1 + $0x38] sm:$0xf]
  %v69 = vld [vmem:[%s1 + $0x3c] sm:$0xf]
  %v86 = vunpack.c.l.b16 %v38
  %v87 = vunpack.c.l.b16 %v39
  %v88 = vunpack.c.l.b16 %v40
  %v89 = vunpack.c.l.b16 %v41
  %v90 = vunpack.c.l.b16 %v42
  %v91 = vunpack.c.l.b16 %v43
  %v92 = vunpack.c.l.b16 %v44
  %v93 = vunpack.c.l.b16 %v45
  %v94 = vunpack.c.l.b16 %v46
  %v95 = vunpack.c.l.b16 %v47
  %v96 = vunpack.c.l.b16 %v48
  %v97 = vunpack.c.l.b16 %v49
  %v98 = vunpack.c.l.b16 %v50
  %v99 = vunpack.c.l.b16 %v51
  %v100 = vunpack.c.l.b16 %v52
  %v101 = vunpack.c.l.b16 %v53
  %v102 = vpack.c.b16 %v87, %v86
  %v103 = vpack.c.b16 %v89, %v88
  %v104 = vpack.c.b16 %v91, %v90
  %v105 = vpack.c.b16 %v93, %v92
  %v106 = vpack.c.b16 %v95, %v94
  %v107 = vpack.c.b16 %v97, %v96
  %v108 = vpack.c.b16 %v99, %v98
  %v109 = vpack.c.b16 %v101, %v100
  %v134 = vunpack.c.l.b16 %v54
  %v135 = vunpack.c.l.b16 %v55
  %v136 = vunpack.c.l.b16 %v56
  %v137 = vunpack.c.l.b16 %v57
  %v138 = vunpack.c.l.b16 %v58
  %v139 = vunpack.c.l.b16 %v59
  %v140 = vunpack.c.l.b16 %v60
  %v141 = vunpack.c.l.b16 %v61
  %v142 = vunpack.c.l.b16 %v62
  %v143 = vunpack.c.l.b16 %v63
  %v144 = vunpack.c.l.b16 %v64
  %v145 = vunpack.c.l.b16 %v65
  %v146 = vunpack.c.l.b16 %v66
  %v147 = vunpack.c.l.b16 %v67
  %v148 = vunpack.c.l.b16 %v68
  %v149 = vunpack.c.l.b16 %v69
  %v150 = vpack.c.b16 %v135, %v134
  %v151 = vpack.c.b16 %v137, %v136
  %v152 = vpack.c.b16 %v139, %v138
  %v153 = vpack.c.b16 %v141, %v140
  %v154 = vpack.c.b16 %v143, %v142
  %v155 = vpack.c.b16 %v145, %v144
  %v156 = vpack.c.b16 %v147, %v146
  %v157 = vpack.c.b16 %v149, %v148
  %166 = vmatprep.subr.bf16.mxu0 0
  %167 = vmatpush1.bf16.msra.mxu0 %v150
  %168 = vmatprep.subr.bf16.mxu0 0
  %169 = vmatpush1.bf16.msra.mxu0 %v151
  %170 = vmatprep.subr.bf16.mxu0 0
  %171 = vmatpush1.bf16.msra.mxu0 %v152
  %172 = vmatprep.subr.bf16.mxu0 0
  %173 = vmatpush1.bf16.msra.mxu0 %v153
  %174 = vmatprep.subr.bf16.mxu0 0
  %175 = vmatpush1.bf16.msra.mxu0 %v154
  %176 = vmatprep.subr.bf16.mxu0 0
  %177 = vmatpush1.bf16.msra.mxu0 %v155
  %178 = vmatprep.subr.bf16.mxu0 0
  %179 = vmatpush1.bf16.msra.mxu0 %v156
  %180 = vmatprep.subr.bf16.mxu0 0
  %181 = vmatpush1.bf16.msra.mxu0 %v157
  %182 = vmatprep.subr.bf16.mxu0 0
  %183 = vmatpush1.bf16.msra.mxu0 0
  %184 = vmatprep.subr.bf16.mxu0 0
  %185 = vmatpush1.bf16.msra.mxu0 0
  %186 = vmatprep.subr.bf16.mxu0 0
  %187 = vmatpush1.bf16.msra.mxu0 0
  %188 = vmatprep.subr.bf16.mxu0 0
  %189 = vmatpush1.bf16.msra.mxu0 0
  %190 = vmatprep.subr.bf16.mxu0 0
  %191 = vmatpush1.bf16.msra.mxu0 0
  %192 = vmatprep.subr.bf16.mxu0 0
  %193 = vmatpush1.bf16.msra.mxu0 0
  %194 = vmatprep.subr.bf16.mxu0 0
  %195 = vmatpush1.bf16.msra.mxu0 0
  %196 = vmatprep.subr.bf16.mxu0 0
  %197 = vmatpush1.bf16.msra.mxu0 0
  %198 = vmatprep.mubr.bf16.mxu0 0
  %199 = vmatmul.mubr.bf16.gmra.mrb[0].mxu0 %v102
  %v200 = vpop.f32.mrb[0].mxu0
  %v201 = vadd.f32 0.0, %v200
  %v202 = vpop.f32.mrb[0].mxu0
  %v203 = vpop.f32.mrb[0].mxu0
  %v204 = vadd.f32 0.0, %v203
  %v205 = vpop.f32.mrb[0].mxu0
  %206 = vmatprep.mubr.bf16.mxu0 0
  %207 = vmatmul.mubr.bf16.gmra.mrb[0].mxu0 %v103
  %v208 = vpop.f32.mrb[0].mxu0
  %v209 = vadd.f32 0.0, %v208
  %v210 = vpop.f32.mrb[0].mxu0
  %v211 = vpop.f32.mrb[0].mxu0
  %v212 = vadd.f32 0.0, %v211
  %v213 = vpop.f32.mrb[0].mxu0
  %214 = vmatprep.mubr.bf16.mxu0 0
  %215 = vmatmul.mubr.bf16.gmra.mrb[0].mxu0 %v104
  %v216 = vpop.f32.mrb[0].mxu0
  %v217 = vadd.f32 0.0, %v216
  %v218 = vpop.f32.mrb[0].mxu0
  %v219 = vpop.f32.mrb[0].mxu0
  %v220 = vadd.f32 0.0, %v219
  %v221 = vpop.f32.mrb[0].mxu0
  %222 = vmatprep.mubr.bf16.mxu0 0
  %223 = vmatmul.mubr.bf16.gmra.mrb[0].mxu0 %v105
  %v224 = vpop.f32.mrb[0].mxu0
  %v225 = vadd.f32 0.0, %v224
  %v226 = vpop.f32.mrb[0].mxu0
  %v227 = vpop.f32.mrb[0].mxu0
  %v228 = vadd.f32 0.0, %v227
  %v229 = vpop.f32.mrb[0].mxu0
  %230 = vmatprep.mubr.bf16.mxu0 0
  %231 = vmatmul.mubr.bf16.gmra.mrb[0].mxu0 %v106
  %v232 = vpop.f32.mrb[0].mxu0
  %v233 = vadd.f32 0.0, %v232
  %v234 = vpop.f32.mrb[0].mxu0
  %v235 = vpop.f32.mrb[0].mxu0
  %v236 = vadd.f32 0.0, %v235
  %v237 = vpop.f32.mrb[0].mxu0
  %238 = vmatprep.mubr.bf16.mxu0 0
  %239 = vmatmul.mubr.bf16.gmra.mrb[0].mxu0 %v107
  %v240 = vpop.f32.mrb[0].mxu0
  %v241 = vadd.f32 0.0, %v240
  %v242 = vpop.f32.mrb[0].mxu0
  %v243 = vpop.f32.mrb[0].mxu0
  %v244 = vadd.f32 0.0, %v243
  %v245 = vpop.f32.mrb[0].mxu0
  %246 = vmatprep.mubr.bf16.mxu0 0
  %247 = vmatmul.mubr.bf16.gmra.mrb[0].mxu0 %v108
  %v248 = vpop.f32.mrb[0].mxu0
  %v249 = vadd.f32 0.0, %v248
  %v250 = vpop.f32.mrb[0].mxu0
  %v251 = vpop.f32.mrb[0].mxu0
  %v252 = vadd.f32 0.0, %v251
  %v253 = vpop.f32.mrb[0].mxu0
  %254 = vmatprep.mubr.bf16.mxu0 0
  %255 = vmatmul.mubr.bf16.gmra.mrb[0].mxu0 %v109
  %v256 = vpop.f32.mrb[0].mxu0
  %v257 = vadd.f32 0.0, %v256
  %v258 = vpop.f32.mrb[0].mxu0
  %v259 = vpop.f32.mrb[0].mxu0
  %v260 = vadd.f32 0.0, %v259
  %v261 = vpop.f32.mrb[0].mxu0
  %262 = vdwg.mxu0
  %v263 = vpack.c.bf16 %v204, %v201
  %v264 = vpack.c.bf16 %v212, %v209
  %v265 = vpack.c.bf16 %v220, %v217
  %v266 = vpack.c.bf16 %v228, %v225
  %v267 = vpack.c.bf16 %v236, %v233
  %v268 = vpack.c.bf16 %v244, %v241
  %v269 = vpack.c.bf16 %v252, %v249
  %v270 = vpack.c.bf16 %v260, %v257
  %v271 = vld [vmem:[%s2] sm:$0xf]
  %v272 = vld [vmem:[%s2 + $0x4] sm:$0xf]
  %v273 = vld [vmem:[%s2 + $0x8] sm:$0xf]
  %v274 = vld [vmem:[%s2 + $0xc] sm:$0xf]
  %v275 = vld [vmem:[%s2 + $0x10] sm:$0xf]
  %v276 = vld [vmem:[%s2 + $0x14] sm:$0xf]
  %v277 = vld [vmem:[%s2 + $0x18] sm:$0xf]
  %v278 = vld [vmem:[%s2 + $0x1c] sm:$0xf]
  %v279 = vld [vmem:[%s2 + $0x20] sm:$0xf]
  %v280 = vld [vmem:[%s2 + $0x24] sm:$0xf]
  %v281 = vld [vmem:[%s2 + $0x28] sm:$0xf]
  %v282 = vld [vmem:[%s2 + $0x2c] sm:$0xf]
  %v283 = vld [vmem:[%s2 + $0x30] sm:$0xf]
  %v284 = vld [vmem:[%s2 + $0x34] sm:$0xf]
  %v285 = vld [vmem:[%s2 + $0x38] sm:$0xf]
  %v286 = vld [vmem:[%s2 + $0x3c] sm:$0xf]
  %v287 = vld [vmem:[%s3] sm:$0x1]
  %v289 = vlaneseq
  %v290 = vshrl.u32 %v289, 7
  %v291 = vsub.s32 0, %v290
  %v292 = vrot.slane %v287, %v291
  %v310 = vunpack.c.l.b16 %v271
  %v311 = vunpack.c.l.b16 %v272
  %v312 = vunpack.c.l.b16 %v273
  %v313 = vunpack.c.l.b16 %v274
  %v314 = vunpack.c.l.b16 %v275
  %v315 = vunpack.c.l.b16 %v276
  %v316 = vunpack.c.l.b16 %v277
  %v317 = vunpack.c.l.b16 %v278
  %v318 = vunpack.c.l.b16 %v279
  %v319 = vunpack.c.l.b16 %v280
  %v320 = vunpack.c.l.b16 %v281
  %v321 = vunpack.c.l.b16 %v282
  %v322 = vunpack.c.l.b16 %v283
  %v323 = vunpack.c.l.b16 %v284
  %v324 = vunpack.c.l.b16 %v285
  %v325 = vunpack.c.l.b16 %v286
  %v326 = vpack.c.b16 %v311, %v310
  %v327 = vpack.c.b16 %v313, %v312
  %v328 = vpack.c.b16 %v315, %v314
  %v329 = vpack.c.b16 %v317, %v316
  %v330 = vpack.c.b16 %v319, %v318
  %v331 = vpack.c.b16 %v321, %v320
  %v332 = vpack.c.b16 %v323, %v322
  %v333 = vpack.c.b16 %v325, %v324
  %342 = vmatprep.subr.bf16.mxu0 0
  %343 = vmatpush1.bf16.msra.mxu0 %v326
  %344 = vmatprep.subr.bf16.mxu0 0
  %345 = vmatpush1.bf16.msra.mxu0 %v327
  %346 = vmatprep.subr.bf16.mxu0 0
  %347 = vmatpush1.bf16.msra.mxu0 %v328
  %348 = vmatprep.subr.bf16.mxu0 0
  %349 = vmatpush1.bf16.msra.mxu0 %v329
  %350 = vmatprep.subr.bf16.mxu0 0
  %351 = vmatpush1.bf16.msra.mxu0 %v330
  %352 = vmatprep.subr.bf16.mxu0 0
  %353 = vmatpush1.bf16.msra.mxu0 %v331
  %354 = vmatprep.subr.bf16.mxu0 0
  %355 = vmatpush1.bf16.msra.mxu0 %v332
  %356 = vmatprep.subr.bf16.mxu0 0
  %357 = vmatpush1.bf16.msra.mxu0 %v333
  %358 = vmatprep.subr.bf16.mxu0 0
  %359 = vmatpush1.bf16.msra.mxu0 0
  %360 = vmatprep.subr.bf16.mxu0 0
  %361 = vmatpush1.bf16.msra.mxu0 0
  %362 = vmatprep.subr.bf16.mxu0 0
  %363 = vmatpush1.bf16.msra.mxu0 0
  %364 = vmatprep.subr.bf16.mxu0 0
  %365 = vmatpush1.bf16.msra.mxu0 0
  %366 = vmatprep.subr.bf16.mxu0 0
  %367 = vmatpush1.bf16.msra.mxu0 0
  %368 = vmatprep.subr.bf16.mxu0 0
  %369 = vmatpush1.bf16.msra.mxu0 0
  %370 = vmatprep.subr.bf16.mxu0 0
  %371 = vmatpush1.bf16.msra.mxu0 0
  %372 = vmatprep.subr.bf16.mxu0 0
  %373 = vmatpush1.bf16.msra.mxu0 0
  %374 = vmatprep.mubr.bf16.mxu0 0
  %375 = vmatmul.mubr.bf16.gmra.mrb[0].mxu0 %v263
  %v376 = vpop.f32.mrb[0].mxu0
  %v377 = vadd.f32 %v292, %v376
  %v378 = vpop.f32.mrb[0].mxu0
  %v379 = vpop.f32.mrb[0].mxu0
  %v380 = vadd.f32 %v292, %v379
  %v381 = vpop.f32.mrb[0].mxu0
  %382 = vmatprep.mubr.bf16.mxu0 0
  %383 = vmatmul.mubr.bf16.gmra.mrb[0].mxu0 %v264
  %v384 = vpop.f32.mrb[0].mxu0
  %v385 = vadd.f32 %v292, %v384
  %v386 = vpop.f32.mrb[0].mxu0
  %v387 = vpop.f32.mrb[0].mxu0
  %v388 = vadd.f32 %v292, %v387
  %v389 = vpop.f32.mrb[0].mxu0
  %390 = vmatprep.mubr.bf16.mxu0 0
  %391 = vmatmul.mubr.bf16.gmra.mrb[0].mxu0 %v265
  %v392 = vpop.f32.mrb[0].mxu0
  %v393 = vadd.f32 %v292, %v392
  %v394 = vpop.f32.mrb[0].mxu0
  %v395 = vpop.f32.mrb[0].mxu0
  %v396 = vadd.f32 %v292, %v395
  %v397 = vpop.f32.mrb[0].mxu0
  %398 = vmatprep.mubr.bf16.mxu0 0
  %399 = vmatmul.mubr.bf16.gmra.mrb[0].mxu0 %v266
  %v400 = vpop.f32.mrb[0].mxu0
  %v401 = vadd.f32 %v292, %v400
  %v402 = vpop.f32.mrb[0].mxu0
  %v403 = vpop.f32.mrb[0].mxu0
  %v404 = vadd.f32 %v292, %v403
  %v405 = vpop.f32.mrb[0].mxu0
  %406 = vmatprep.mubr.bf16.mxu0 0
  %407 = vmatmul.mubr.bf16.gmra.mrb[0].mxu0 %v267
  %v408 = vpop.f32.mrb[0].mxu0
  %v409 = vadd.f32 %v292, %v408
  %v410 = vpop.f32.mrb[0].mxu0
  %v411 = vpop.f32.mrb[0].mxu0
  %v412 = vadd.f32 %v292, %v411
  %v413 = vpop.f32.mrb[0].mxu0
  %414 = vmatprep.mubr.bf16.mxu0 0
  %415 = vmatmul.mubr.bf16.gmra.mrb[0].mxu0 %v268
  %v416 = vpop.f32.mrb[0].mxu0
  %v417 = vadd.f32 %v292, %v416
  %v418 = vpop.f32.mrb[0].mxu0
  %v419 = vpop.f32.mrb[0].mxu0
  %v420 = vadd.f32 %v292, %v419
  %v421 = vpop.f32.mrb[0].mxu0
  %422 = vmatprep.mubr.bf16.mxu0 0
  %423 = vmatmul.mubr.bf16.gmra.mrb[0].mxu0 %v269
  %v424 = vpop.f32.mrb[0].mxu0
  %v425 = vadd.f32 %v292, %v424
  %v426 = vpop.f32.mrb[0].mxu0
  %v427 = vpop.f32.mrb[0].mxu0
  %v428 = vadd.f32 %v292, %v427
  %v429 = vpop.f32.mrb[0].mxu0
  %430 = vmatprep.mubr.bf16.mxu0 0
  %431 = vmatmul.mubr.bf16.gmra.mrb[0].mxu0 %v270
  %v432 = vpop.f32.mrb[0].mxu0
  %v433 = vadd.f32 %v292, %v432
  %v434 = vpop.f32.mrb[0].mxu0
  %v435 = vpop.f32.mrb[0].mxu0
  %v436 = vadd.f32 %v292, %v435
  %v437 = vpop.f32.mrb[0].mxu0
  %438 = vdwg.mxu0
  %v439 = vmax.f32 %v377, 0.0
  %v440 = vmax.f32 %v380, 0.0
  %v441 = vmax.f32 %v385, 0.0
  %v442 = vmax.f32 %v388, 0.0
  %v443 = vmax.f32 %v393, 0.0
  %v444 = vmax.f32 %v396, 0.0
  %v445 = vmax.f32 %v401, 0.0
  %v446 = vmax.f32 %v404, 0.0
  %v447 = vmax.f32 %v409, 0.0
  %v448 = vmax.f32 %v412, 0.0
  %v449 = vmax.f32 %v417, 0.0
  %v450 = vmax.f32 %v420, 0.0
  %v451 = vmax.f32 %v425, 0.0
  %v452 = vmax.f32 %v428, 0.0
  %v453 = vmax.f32 %v433, 0.0
  %v454 = vmax.f32 %v436, 0.0
  %v455 = vpack.c.bf16 %v440, %v439
  %v456 = vpack.c.bf16 %v442, %v441
  %v457 = vpack.c.bf16 %v444, %v443
  %v458 = vpack.c.bf16 %v446, %v445
  %v459 = vpack.c.bf16 %v448, %v447
  %v460 = vpack.c.bf16 %v450, %v449
  %v461 = vpack.c.bf16 %v452, %v451
  %v462 = vpack.c.bf16 %v454, %v453
  %463 = vmatprep.subr.bf16.mxu0 0
  %464 = vmatpush1.bf16.msra.mxu0 %v455
  %465 = vmatprep.subr.bf16.mxu0 0
  %466 = vmatpush1.bf16.msra.mxu0 %v456
  %467 = vmatprep.subr.bf16.mxu0 0
  %468 = vmatpush1.bf16.msra.mxu0 %v457
  %469 = vmatprep.subr.bf16.mxu0 0
  %470 = vmatpush1.bf16.msra.mxu0 %v458
  %471 = vmatprep.subr.bf16.mxu0 0
  %472 = vmatpush1.bf16.msra.mxu0 %v459
  %473 = vmatprep.subr.bf16.mxu0 0
  %474 = vmatpush1.bf16.msra.mxu0 %v460
  %475 = vmatprep.subr.bf16.mxu0 0
  %476 = vmatpush1.bf16.msra.mxu0 %v461
  %477 = vmatprep.subr.bf16.mxu0 0
  %478 = vmatpush1.bf16.msra.mxu0 %v462
  %479 = vmatprep.subr.bf16.mxu0 0
  %480 = vmatpush1.bf16.msra.mxu0 0
  %481 = vmatprep.subr.bf16.mxu0 0
  %482 = vmatpush1.bf16.msra.mxu0 0
  %483 = vmatprep.subr.bf16.mxu0 0
  %484 = vmatpush1.bf16.msra.mxu0 0
  %485 = vmatprep.subr.bf16.mxu0 0
  %486 = vmatpush1.bf16.msra.mxu0 0
  %487 = vmatprep.subr.bf16.mxu0 0
  %488 = vmatpush1.bf16.msra.mxu0 0
  %489 = vmatprep.subr.bf16.mxu0 0
  %490 = vmatpush1.bf16.msra.mxu0 0
  %491 = vmatprep.subr.bf16.mxu0 0
  %492 = vmatpush1.bf16.msra.mxu0 0
  %493 = vmatprep.subr.bf16.mxu0 0
  %494 = vmatpush1.bf16.msra.mxu0 0
  %495 = vmatprep.mubr.bf16.mxu0 0
  %496 = vmatmul.mubr.bf16.gmra.mrb[0].mxu0 %v102
  %v497 = vpop.f32.mrb[0].mxu0
  %v498 = vadd.f32 0.0, %v497
  %v499 = vpop.f32.mrb[0].mxu0
  %v500 = vpop.f32.mrb[0].mxu0
  %v501 = vadd.f32 0.0, %v500
  %v502 = vpop.f32.mrb[0].mxu0
  %503 = vmatprep.mubr.bf16.mxu0 0
  %504 = vmatmul.mubr.bf16.gmra.mrb[0].mxu0 %v103
  %v505 = vpop.f32.mrb[0].mxu0
  %v506 = vadd.f32 0.0, %v505
  %v507 = vpop.f32.mrb[0].mxu0
  %v508 = vpop.f32.mrb[0].mxu0
  %v509 = vadd.f32 0.0, %v508
  %v510 = vpop.f32.mrb[0].mxu0
  %511 = vmatprep.mubr.bf16.mxu0 0
  %512 = vmatmul.mubr.bf16.gmra.mrb[0].mxu0 %v104
  %v513 = vpop.f32.mrb[0].mxu0
  %v514 = vadd.f32 0.0, %v513
  %v515 = vpop.f32.mrb[0].mxu0
  %v516 = vpop.f32.mrb[0].mxu0
  %v517 = vadd.f32 0.0, %v516
  %v518 = vpop.f32.mrb[0].mxu0
  %519 = vmatprep.mubr.bf16.mxu0 0
  %520 = vmatmul.mubr.bf16.gmra.mrb[0].mxu0 %v105
  %v521 = vpop.f32.mrb[0].mxu0
  %v522 = vadd.f32 0.0, %v521
  %v523 = vpop.f32.mrb[0].mxu0
  %v524 = vpop.f32.mrb[0].mxu0
  %v525 = vadd.f32 0.0, %v524
  %v526 = vpop.f32.mrb[0].mxu0
  %527 = vmatprep.mubr.bf16.mxu0 0
  %528 = vmatmul.mubr.bf16.gmra.mrb[0].mxu0 %v106
  %v529 = vpop.f32.mrb[0].mxu0
  %v530 = vadd.f32 0.0, %v529
  %v531 = vpop.f32.mrb[0].mxu0
  %v532 = vpop.f32.mrb[0].mxu0
  %v533 = vadd.f32 0.0, %v532
  %v534 = vpop.f32.mrb[0].mxu0
  %535 = vmatprep.mubr.bf16.mxu0 0
  %536 = vmatmul.mubr.bf16.gmra.mrb[0].mxu0 %v107
  %v537 = vpop.f32.mrb[0].mxu0
  %v538 = vadd.f32 0.0, %v537
  %v539 = vpop.f32.mrb[0].mxu0
  %v540 = vpop.f32.mrb[0].mxu0
  %v541 = vadd.f32 0.0, %v540
  %v542 = vpop.f32.mrb[0].mxu0
  %543 = vmatprep.mubr.bf16.mxu0 0
  %544 = vmatmul.mubr.bf16.gmra.mrb[0].mxu0 %v108
  %v545 = vpop.f32.mrb[0].mxu0
  %v546 = vadd.f32 0.0, %v545
  %v547 = vpop.f32.mrb[0].mxu0
  %v548 = vpop.f32.mrb[0].mxu0
  %v549 = vadd.f32 0.0, %v548
  %v550 = vpop.f32.mrb[0].mxu0
  %551 = vmatprep.mubr.bf16.mxu0 0
  %552 = vmatmul.mubr.bf16.gmra.mrb[0].mxu0 %v109
  %v553 = vpop.f32.mrb[0].mxu0
  %v554 = vadd.f32 0.0, %v553
  %v555 = vpop.f32.mrb[0].mxu0
  %v556 = vpop.f32.mrb[0].mxu0
  %v557 = vadd.f32 0.0, %v556
  %v558 = vpop.f32.mrb[0].mxu0
  %559 = vdwg.mxu0
  %v560 = vpack.c.bf16 %v501, %v498
  %v561 = vpack.c.bf16 %v509, %v506
  %v562 = vpack.c.bf16 %v517, %v514
  %v563 = vpack.c.bf16 %v525, %v522
  %v564 = vpack.c.bf16 %v533, %v530
  %v565 = vpack.c.bf16 %v541, %v538
  %v566 = vpack.c.bf16 %v549, %v546
  %v567 = vpack.c.bf16 %v557, %v554
  %v568 = vld [vmem:[%s4] sm:$0xf]
  %v569 = vld [vmem:[%s4 + $0x4] sm:$0xf]
  %v570 = vld [vmem:[%s4 + $0x8] sm:$0xf]
  %v571 = vld [vmem:[%s4 + $0xc] sm:$0xf]
  %v572 = vld [vmem:[%s4 + $0x10] sm:$0xf]
  %v573 = vld [vmem:[%s4 + $0x14] sm:$0xf]
  %v574 = vld [vmem:[%s4 + $0x18] sm:$0xf]
  %v575 = vld [vmem:[%s4 + $0x1c] sm:$0xf]
  %v576 = vld [vmem:[%s4 + $0x20] sm:$0xf]
  %v577 = vld [vmem:[%s4 + $0x24] sm:$0xf]
  %v578 = vld [vmem:[%s4 + $0x28] sm:$0xf]
  %v579 = vld [vmem:[%s4 + $0x2c] sm:$0xf]
  %v580 = vld [vmem:[%s4 + $0x30] sm:$0xf]
  %v581 = vld [vmem:[%s4 + $0x34] sm:$0xf]
  %v582 = vld [vmem:[%s4 + $0x38] sm:$0xf]
  %v583 = vld [vmem:[%s4 + $0x3c] sm:$0xf]
  %v584 = vld [vmem:[%s5] sm:$0x1]
  %v586 = vlaneseq
  %v587 = vshrl.u32 %v586, 7
  %v588 = vsub.s32 0, %v587
  %v589 = vrot.slane %v584, %v588
  %v607 = vunpack.c.l.b16 %v568
  %v608 = vunpack.c.l.b16 %v569
  %v609 = vunpack.c.l.b16 %v570
  %v610 = vunpack.c.l.b16 %v571
  %v611 = vunpack.c.l.b16 %v572
  %v612 = vunpack.c.l.b16 %v573
  %v613 = vunpack.c.l.b16 %v574
  %v614 = vunpack.c.l.b16 %v575
  %v615 = vunpack.c.l.b16 %v576
  %v616 = vunpack.c.l.b16 %v577
  %v617 = vunpack.c.l.b16 %v578
  %v618 = vunpack.c.l.b16 %v579
  %v619 = vunpack.c.l.b16 %v580
  %v620 = vunpack.c.l.b16 %v581
  %v621 = vunpack.c.l.b16 %v582
  %v622 = vunpack.c.l.b16 %v583
  %v623 = vpack.c.b16 %v608, %v607
  %v624 = vpack.c.b16 %v610, %v609
  %v625 = vpack.c.b16 %v612, %v611
  %v626 = vpack.c.b16 %v614, %v613
  %v627 = vpack.c.b16 %v616, %v615
  %v628 = vpack.c.b16 %v618, %v617
  %v629 = vpack.c.b16 %v620, %v619
  %v630 = vpack.c.b16 %v622, %v621
  %639 = vmatprep.subr.bf16.mxu0 0
  %640 = vmatpush1.bf16.msra.mxu0 %v623
  %641 = vmatprep.subr.bf16.mxu0 0
  %642 = vmatpush1.bf16.msra.mxu0 %v624
  %643 = vmatprep.subr.bf16.mxu0 0
  %644 = vmatpush1.bf16.msra.mxu0 %v625
  %645 = vmatprep.subr.bf16.mxu0 0
  %646 = vmatpush1.bf16.msra.mxu0 %v626
  %647 = vmatprep.subr.bf16.mxu0 0
  %648 = vmatpush1.bf16.msra.mxu0 %v627
  %649 = vmatprep.subr.bf16.mxu0 0
  %650 = vmatpush1.bf16.msra.mxu0 %v628
  %651 = vmatprep.subr.bf16.mxu0 0
  %652 = vmatpush1.bf16.msra.mxu0 %v629
  %653 = vmatprep.subr.bf16.mxu0 0
  %654 = vmatpush1.bf16.msra.mxu0 %v630
  %655 = vmatprep.subr.bf16.mxu0 0
  %656 = vmatpush1.bf16.msra.mxu0 0
  %657 = vmatprep.subr.bf16.mxu0 0
  %658 = vmatpush1.bf16.msra.mxu0 0
  %659 = vmatprep.subr.bf16.mxu0 0
  %660 = vmatpush1.bf16.msra.mxu0 0
  %661 = vmatprep.subr.bf16.mxu0 0
  %662 = vmatpush1.bf16.msra.mxu0 0
  %663 = vmatprep.subr.bf16.mxu0 0
  %664 = vmatpush1.bf16.msra.mxu0 0
  %665 = vmatprep.subr.bf16.mxu0 0
  %666 = vmatpush1.bf16.msra.mxu0 0
  %667 = vmatprep.subr.bf16.mxu0 0
  %668 = vmatpush1.bf16.msra.mxu0 0
  %669 = vmatprep.subr.bf16.mxu0 0
  %670 = vmatpush1.bf16.msra.mxu0 0
  %671 = vmatprep.mubr.bf16.mxu0 0
  %672 = vmatmul.mubr.bf16.gmra.mrb[0].mxu0 %v560
  %v673 = vpop.f32.mrb[0].mxu0
  %v674 = vadd.f32 %v589, %v673
  %v675 = vpop.f32.mrb[0].mxu0
  %v676 = vpop.f32.mrb[0].mxu0
  %v677 = vadd.f32 %v589, %v676
  %v678 = vpop.f32.mrb[0].mxu0
  %679 = vmatprep.mubr.bf16.mxu0 0
  %680 = vmatmul.mubr.bf16.gmra.mrb[0].mxu0 %v561
  %v681 = vpop.f32.mrb[0].mxu0
  %v682 = vadd.f32 %v589, %v681
  %v683 = vpop.f32.mrb[0].mxu0
  %v684 = vpop.f32.mrb[0].mxu0
  %v685 = vadd.f32 %v589, %v684
  %v686 = vpop.f32.mrb[0].mxu0
  %687 = vmatprep.mubr.bf16.mxu0 0
  %688 = vmatmul.mubr.bf16.gmra.mrb[0].mxu0 %v562
  %v689 = vpop.f32.mrb[0].mxu0
  %v690 = vadd.f32 %v589, %v689
  %v691 = vpop.f32.mrb[0].mxu0
  %v692 = vpop.f32.mrb[0].mxu0
  %v693 = vadd.f32 %v589, %v692
  %v694 = vpop.f32.mrb[0].mxu0
  %695 = vmatprep.mubr.bf16.mxu0 0
  %696 = vmatmul.mubr.bf16.gmra.mrb[0].mxu0 %v563
  %v697 = vpop.f32.mrb[0].mxu0
  %v698 = vadd.f32 %v589, %v697
  %v699 = vpop.f32.mrb[0].mxu0
  %v700 = vpop.f32.mrb[0].mxu0
  %v701 = vadd.f32 %v589, %v700
  %v702 = vpop.f32.mrb[0].mxu0
  %703 = vmatprep.mubr.bf16.mxu0 0
  %704 = vmatmul.mubr.bf16.gmra.mrb[0].mxu0 %v564
  %v705 = vpop.f32.mrb[0].mxu0
  %v706 = vadd.f32 %v589, %v705
  %v707 = vpop.f32.mrb[0].mxu0
  %v708 = vpop.f32.mrb[0].mxu0
  %v709 = vadd.f32 %v589, %v708
  %v710 = vpop.f32.mrb[0].mxu0
  %711 = vmatprep.mubr.bf16.mxu0 0
  %712 = vmatmul.mubr.bf16.gmra.mrb[0].mxu0 %v565
  %v713 = vpop.f32.mrb[0].mxu0
  %v714 = vadd.f32 %v589, %v713
  %v715 = vpop.f32.mrb[0].mxu0
  %v716 = vpop.f32.mrb[0].mxu0
  %v717 = vadd.f32 %v589, %v716
  %v718 = vpop.f32.mrb[0].mxu0
  %719 = vmatprep.mubr.bf16.mxu0 0
  %720 = vmatmul.mubr.bf16.gmra.mrb[0].mxu0 %v566
  %v721 = vpop.f32.mrb[0].mxu0
  %v722 = vadd.f32 %v589, %v721
  %v723 = vpop.f32.mrb[0].mxu0
  %v724 = vpop.f32.mrb[0].mxu0
  %v725 = vadd.f32 %v589, %v724
  %v726 = vpop.f32.mrb[0].mxu0
  %727 = vmatprep.mubr.bf16.mxu0 0
  %728 = vmatmul.mubr.bf16.gmra.mrb[0].mxu0 %v567
  %v729 = vpop.f32.mrb[0].mxu0
  %v730 = vadd.f32 %v589, %v729
  %v731 = vpop.f32.mrb[0].mxu0
  %v732 = vpop.f32.mrb[0].mxu0
  %v733 = vadd.f32 %v589, %v732
  %v734 = vpop.f32.mrb[0].mxu0
  %735 = vdwg.mxu0
  %v736 = vpack.c.bf16 %v677, %v674
  %v737 = vpack.c.bf16 %v685, %v682
  %v738 = vpack.c.bf16 %v693, %v690
  %v739 = vpack.c.bf16 %v701, %v698
  %v740 = vpack.c.bf16 %v709, %v706
  %v741 = vpack.c.bf16 %v717, %v714
  %v742 = vpack.c.bf16 %v725, %v722
  %v743 = vpack.c.bf16 %v733, %v730
  %744 = vmatprep.subr.bf16.mxu0 0
  %745 = vmatpush1.bf16.msra.mxu0 %v736
  %746 = vmatprep.subr.bf16.mxu0 0
  %747 = vmatpush1.bf16.msra.mxu0 %v737
  %748 = vmatprep.subr.bf16.mxu0 0
  %749 = vmatpush1.bf16.msra.mxu0 %v738
  %750 = vmatprep.subr.bf16.mxu0 0
  %751 = vmatpush1.bf16.msra.mxu0 %v739
  %752 = vmatprep.subr.bf16.mxu0 0
  %753 = vmatpush1.bf16.msra.mxu0 %v740
  %754 = vmatprep.subr.bf16.mxu0 0
  %755 = vmatpush1.bf16.msra.mxu0 %v741
  %756 = vmatprep.subr.bf16.mxu0 0
  %757 = vmatpush1.bf16.msra.mxu0 %v742
  %758 = vmatprep.subr.bf16.mxu0 0
  %759 = vmatpush1.bf16.msra.mxu0 %v743
  %760 = vmatprep.subr.bf16.mxu0 0
  %761 = vmatpush1.bf16.msra.mxu0 0
  %762 = vmatprep.subr.bf16.mxu0 0
  %763 = vmatpush1.bf16.msra.mxu0 0
  %764 = vmatprep.subr.bf16.mxu0 0
  %765 = vmatpush1.bf16.msra.mxu0 0
  %766 = vmatprep.subr.bf16.mxu0 0
  %767 = vmatpush1.bf16.msra.mxu0 0
  %768 = vmatprep.subr.bf16.mxu0 0
  %769 = vmatpush1.bf16.msra.mxu0 0
  %770 = vmatprep.subr.bf16.mxu0 0
  %771 = vmatpush1.bf16.msra.mxu0 0
  %772 = vmatprep.subr.bf16.mxu0 0
  %773 = vmatpush1.bf16.msra.mxu0 0
  %774 = vmatprep.subr.bf16.mxu0 0
  %775 = vmatpush1.bf16.msra.mxu0 0
  %776 = vmatprep.mubr.bf16.mxu0 0
  %777 = vmatmul.mubr.bf16.gmra.mrb[0].mxu0 %v102
  %v778 = vpop.f32.mrb[0].mxu0
  %v779 = vadd.f32 0.0, %v778
  %v780 = vpop.f32.mrb[0].mxu0
  %v781 = vpop.f32.mrb[0].mxu0
  %v782 = vadd.f32 0.0, %v781
  %v783 = vpop.f32.mrb[0].mxu0
  %784 = vmatprep.mubr.bf16.mxu0 0
  %785 = vmatmul.mubr.bf16.gmra.mrb[0].mxu0 %v103
  %v786 = vpop.f32.mrb[0].mxu0
  %v787 = vadd.f32 0.0, %v786
  %v788 = vpop.f32.mrb[0].mxu0
  %v789 = vpop.f32.mrb[0].mxu0
  %v790 = vadd.f32 0.0, %v789
  %v791 = vpop.f32.mrb[0].mxu0
  %792 = vmatprep.mubr.bf16.mxu0 0
  %793 = vmatmul.mubr.bf16.gmra.mrb[0].mxu0 %v104
  %v794 = vpop.f32.mrb[0].mxu0
  %v795 = vadd.f32 0.0, %v794
  %v796 = vpop.f32.mrb[0].mxu0
  %v797 = vpop.f32.mrb[0].mxu0
  %v798 = vadd.f32 0.0, %v797
  %v799 = vpop.f32.mrb[0].mxu0
  %800 = vmatprep.mubr.bf16.mxu0 0
  %801 = vmatmul.mubr.bf16.gmra.mrb[0].mxu0 %v105
  %v802 = vpop.f32.mrb[0].mxu0
  %v803 = vadd.f32 0.0, %v802
  %v804 = vpop.f32.mrb[0].mxu0
  %v805 = vpop.f32.mrb[0].mxu0
  %v806 = vadd.f32 0.0, %v805
  %v807 = vpop.f32.mrb[0].mxu0
  %808 = vmatprep.mubr.bf16.mxu0 0
  %809 = vmatmul.mubr.bf16.gmra.mrb[0].mxu0 %v106
  %v810 = vpop.f32.mrb[0].mxu0
  %v811 = vadd.f32 0.0, %v810
  %v812 = vpop.f32.mrb[0].mxu0
  %v813 = vpop.f32.mrb[0].mxu0
  %v814 = vadd.f32 0.0, %v813
  %v815 = vpop.f32.mrb[0].mxu0
  %816 = vmatprep.mubr.bf16.mxu0 0
  %817 = vmatmul.mubr.bf16.gmra.mrb[0].mxu0 %v107
  %v818 = vpop.f32.mrb[0].mxu0
  %v819 = vadd.f32 0.0, %v818
  %v820 = vpop.f32.mrb[0].mxu0
  %v821 = vpop.f32.mrb[0].mxu0
  %v822 = vadd.f32 0.0, %v821
  %v823 = vpop.f32.mrb[0].mxu0
  %824 = vmatprep.mubr.bf16.mxu0 0
  %825 = vmatmul.mubr.bf16.gmra.mrb[0].mxu0 %v108
  %v826 = vpop.f32.mrb[0].mxu0
  %v827 = vadd.f32 0.0, %v826
  %v828 = vpop.f32.mrb[0].mxu0
  %v829 = vpop.f32.mrb[0].mxu0
  %v830 = vadd.f32 0.0, %v829
  %v831 = vpop.f32.mrb[0].mxu0
  %832 = vmatprep.mubr.bf16.mxu0 0
  %833 = vmatmul.mubr.bf16.gmra.mrb[0].mxu0 %v109
  %v834 = vpop.f32.mrb[0].mxu0
  %v835 = vadd.f32 0.0, %v834
  %v836 = vpop.f32.mrb[0].mxu0
  %v837 = vpop.f32.mrb[0].mxu0
  %v838 = vadd.f32 0.0, %v837
  %v839 = vpop.f32.mrb[0].mxu0
  %840 = vdwg.mxu0
  %v841 = vpack.c.bf16 %v782, %v779
  %v842 = vpack.c.bf16 %v790, %v787
  %v843 = vpack.c.bf16 %v798, %v795
  %v844 = vpack.c.bf16 %v806, %v803
  %v845 = vpack.c.bf16 %v814, %v811
  %v846 = vpack.c.bf16 %v822, %v819
  %v847 = vpack.c.bf16 %v830, %v827
  %v848 = vpack.c.bf16 %v838, %v835
  %v849 = vld [vmem:[%s6] sm:$0xf]
  %v850 = vld [vmem:[%s6 + $0x4] sm:$0xf]
  %v851 = vld [vmem:[%s6 + $0x8] sm:$0xf]
  %v852 = vld [vmem:[%s6 + $0xc] sm:$0xf]
  %v853 = vld [vmem:[%s6 + $0x10] sm:$0xf]
  %v854 = vld [vmem:[%s6 + $0x14] sm:$0xf]
  %v855 = vld [vmem:[%s6 + $0x18] sm:$0xf]
  %v856 = vld [vmem:[%s6 + $0x1c] sm:$0xf]
  %v857 = vld [vmem:[%s6 + $0x20] sm:$0xf]
  %v858 = vld [vmem:[%s6 + $0x24] sm:$0xf]
  %v859 = vld [vmem:[%s6 + $0x28] sm:$0xf]
  %v860 = vld [vmem:[%s6 + $0x2c] sm:$0xf]
  %v861 = vld [vmem:[%s6 + $0x30] sm:$0xf]
  %v862 = vld [vmem:[%s6 + $0x34] sm:$0xf]
  %v863 = vld [vmem:[%s6 + $0x38] sm:$0xf]
  %v864 = vld [vmem:[%s6 + $0x3c] sm:$0xf]
  %v865 = vld [vmem:[%s7] sm:$0x1]
  %v867 = vlaneseq
  %v868 = vshrl.u32 %v867, 7
  %v869 = vsub.s32 0, %v868
  %v870 = vrot.slane %v865, %v869
  %v888 = vunpack.c.l.b16 %v849
  %v889 = vunpack.c.l.b16 %v850
  %v890 = vunpack.c.l.b16 %v851
  %v891 = vunpack.c.l.b16 %v852
  %v892 = vunpack.c.l.b16 %v853
  %v893 = vunpack.c.l.b16 %v854
  %v894 = vunpack.c.l.b16 %v855
  %v895 = vunpack.c.l.b16 %v856
  %v896 = vunpack.c.l.b16 %v857
  %v897 = vunpack.c.l.b16 %v858
  %v898 = vunpack.c.l.b16 %v859
  %v899 = vunpack.c.l.b16 %v860
  %v900 = vunpack.c.l.b16 %v861
  %v901 = vunpack.c.l.b16 %v862
  %v902 = vunpack.c.l.b16 %v863
  %v903 = vunpack.c.l.b16 %v864
  %v904 = vpack.c.b16 %v889, %v888
  %v905 = vpack.c.b16 %v891, %v890
  %v906 = vpack.c.b16 %v893, %v892
  %v907 = vpack.c.b16 %v895, %v894
  %v908 = vpack.c.b16 %v897, %v896
  %v909 = vpack.c.b16 %v899, %v898
  %v910 = vpack.c.b16 %v901, %v900
  %v911 = vpack.c.b16 %v903, %v902
  %920 = vmatprep.subr.bf16.mxu0 0
  %921 = vmatpush1.bf16.msra.mxu0 %v904
  %922 = vmatprep.subr.bf16.mxu0 0
  %923 = vmatpush1.bf16.msra.mxu0 %v905
  %924 = vmatprep.subr.bf16.mxu0 0
  %925 = vmatpush1.bf16.msra.mxu0 %v906
  %926 = vmatprep.subr.bf16.mxu0 0
  %927 = vmatpush1.bf16.msra.mxu0 %v907
  %928 = vmatprep.subr.bf16.mxu0 0
  %929 = vmatpush1.bf16.msra.mxu0 %v908
  %930 = vmatprep.subr.bf16.mxu0 0
  %931 = vmatpush1.bf16.msra.mxu0 %v909
  %932 = vmatprep.subr.bf16.mxu0 0
  %933 = vmatpush1.bf16.msra.mxu0 %v910
  %934 = vmatprep.subr.bf16.mxu0 0
  %935 = vmatpush1.bf16.msra.mxu0 %v911
  %936 = vmatprep.subr.bf16.mxu0 0
  %937 = vmatpush1.bf16.msra.mxu0 0
  %938 = vmatprep.subr.bf16.mxu0 0
  %939 = vmatpush1.bf16.msra.mxu0 0
  %940 = vmatprep.subr.bf16.mxu0 0
  %941 = vmatpush1.bf16.msra.mxu0 0
  %942 = vmatprep.subr.bf16.mxu0 0
  %943 = vmatpush1.bf16.msra.mxu0 0
  %944 = vmatprep.subr.bf16.mxu0 0
  %945 = vmatpush1.bf16.msra.mxu0 0
  %946 = vmatprep.subr.bf16.mxu0 0
  %947 = vmatpush1.bf16.msra.mxu0 0
  %948 = vmatprep.subr.bf16.mxu0 0
  %949 = vmatpush1.bf16.msra.mxu0 0
  %950 = vmatprep.subr.bf16.mxu0 0
  %951 = vmatpush1.bf16.msra.mxu0 0
  %952 = vmatprep.mubr.bf16.mxu0 0
  %953 = vmatmul.mubr.bf16.gmra.mrb[0].mxu0 %v841
  %v954 = vpop.f32.mrb[0].mxu0
  %v955 = vadd.f32 %v870, %v954
  %v956 = vpop.f32.mrb[0].mxu0
  %v957 = vpop.f32.mrb[0].mxu0
  %v958 = vadd.f32 %v870, %v957
  %v959 = vpop.f32.mrb[0].mxu0
  %960 = vmatprep.mubr.bf16.mxu0 0
  %961 = vmatmul.mubr.bf16.gmra.mrb[0].mxu0 %v842
  %v962 = vpop.f32.mrb[0].mxu0
  %v963 = vadd.f32 %v870, %v962
  %v964 = vpop.f32.mrb[0].mxu0
  %v965 = vpop.f32.mrb[0].mxu0
  %v966 = vadd.f32 %v870, %v965
  %v967 = vpop.f32.mrb[0].mxu0
  %968 = vmatprep.mubr.bf16.mxu0 0
  %969 = vmatmul.mubr.bf16.gmra.mrb[0].mxu0 %v843
  %v970 = vpop.f32.mrb[0].mxu0
  %v971 = vadd.f32 %v870, %v970
  %v972 = vpop.f32.mrb[0].mxu0
  %v973 = vpop.f32.mrb[0].mxu0
  %v974 = vadd.f32 %v870, %v973
  %v975 = vpop.f32.mrb[0].mxu0
  %976 = vmatprep.mubr.bf16.mxu0 0
  %977 = vmatmul.mubr.bf16.gmra.mrb[0].mxu0 %v844
  %v978 = vpop.f32.mrb[0].mxu0
  %v979 = vadd.f32 %v870, %v978
  %v980 = vpop.f32.mrb[0].mxu0
  %v981 = vpop.f32.mrb[0].mxu0
  %v982 = vadd.f32 %v870, %v981
  %v983 = vpop.f32.mrb[0].mxu0
  %984 = vmatprep.mubr.bf16.mxu0 0
  %985 = vmatmul.mubr.bf16.gmra.mrb[0].mxu0 %v845
  %v986 = vpop.f32.mrb[0].mxu0
  %v987 = vadd.f32 %v870, %v986
  %v988 = vpop.f32.mrb[0].mxu0
  %v989 = vpop.f32.mrb[0].mxu0
  %v990 = vadd.f32 %v870, %v989
  %v991 = vpop.f32.mrb[0].mxu0
  %992 = vmatprep.mubr.bf16.mxu0 0
  %993 = vmatmul.mubr.bf16.gmra.mrb[0].mxu0 %v846
  %v994 = vpop.f32.mrb[0].mxu0
  %v995 = vadd.f32 %v870, %v994
  %v996 = vpop.f32.mrb[0].mxu0
  %v997 = vpop.f32.mrb[0].mxu0
  %v998 = vadd.f32 %v870, %v997
  %v999 = vpop.f32.mrb[0].mxu0
  %1000 = vmatprep.mubr.bf16.mxu0 0
  %1001 = vmatmul.mubr.bf16.gmra.mrb[0].mxu0 %v847
  %v1002 = vpop.f32.mrb[0].mxu0
  %v1003 = vadd.f32 %v870, %v1002
  %v1004 = vpop.f32.mrb[0].mxu0
  %v1005 = vpop.f32.mrb[0].mxu0
  %v1006 = vadd.f32 %v870, %v1005
  %v1007 = vpop.f32.mrb[0].mxu0
  %1008 = vmatprep.mubr.bf16.mxu0 0
  %1009 = vmatmul.mubr.bf16.gmra.mrb[0].mxu0 %v848
  %v1010 = vpop.f32.mrb[0].mxu0
  %v1011 = vadd.f32 %v870, %v1010
  %v1012 = vpop.f32.mrb[0].mxu0
  %v1013 = vpop.f32.mrb[0].mxu0
  %v1014 = vadd.f32 %v870, %v1013
  %v1015 = vpop.f32.mrb[0].mxu0
  %1016 = vdwg.mxu0
  %v1017 = vmax.f32 %v955, 0.0
  %v1018 = vmax.f32 %v958, 0.0
  %v1019 = vmax.f32 %v963, 0.0
  %v1020 = vmax.f32 %v966, 0.0
  %v1021 = vmax.f32 %v971, 0.0
  %v1022 = vmax.f32 %v974, 0.0
  %v1023 = vmax.f32 %v979, 0.0
  %v1024 = vmax.f32 %v982, 0.0
  %v1025 = vmax.f32 %v987, 0.0
  %v1026 = vmax.f32 %v990, 0.0
  %v1027 = vmax.f32 %v995, 0.0
  %v1028 = vmax.f32 %v998, 0.0
  %v1029 = vmax.f32 %v1003, 0.0
  %v1030 = vmax.f32 %v1006, 0.0
  %v1031 = vmax.f32 %v1011, 0.0
  %v1032 = vmax.f32 %v1014, 0.0
  %v1033 = vpack.c.bf16 %v1018, %v1017
  %v1034 = vpack.c.bf16 %v1020, %v1019
  %v1035 = vpack.c.bf16 %v1022, %v1021
  %v1036 = vpack.c.bf16 %v1024, %v1023
  %v1037 = vpack.c.bf16 %v1026, %v1025
  %v1038 = vpack.c.bf16 %v1028, %v1027
  %v1039 = vpack.c.bf16 %v1030, %v1029
  %v1040 = vpack.c.bf16 %v1032, %v1031
  %1041 = vmatprep.subr.bf16.mxu0 0
  %1042 = vmatpush1.bf16.msra.mxu0 %v1033
  %1043 = vmatprep.subr.bf16.mxu0 0
  %1044 = vmatpush1.bf16.msra.mxu0 %v1034
  %1045 = vmatprep.subr.bf16.mxu0 0
  %1046 = vmatpush1.bf16.msra.mxu0 %v1035
  %1047 = vmatprep.subr.bf16.mxu0 0
  %1048 = vmatpush1.bf16.msra.mxu0 %v1036
  %1049 = vmatprep.subr.bf16.mxu0 0
  %1050 = vmatpush1.bf16.msra.mxu0 %v1037
  %1051 = vmatprep.subr.bf16.mxu0 0
  %1052 = vmatpush1.bf16.msra.mxu0 %v1038
  %1053 = vmatprep.subr.bf16.mxu0 0
  %1054 = vmatpush1.bf16.msra.mxu0 %v1039
  %1055 = vmatprep.subr.bf16.mxu0 0
  %1056 = vmatpush1.bf16.msra.mxu0 %v1040
  %1057 = vmatprep.subr.bf16.mxu0 0
  %1058 = vmatpush1.bf16.msra.mxu0 0
  %1059 = vmatprep.subr.bf16.mxu0 0
  %1060 = vmatpush1.bf16.msra.mxu0 0
  %1061 = vmatprep.subr.bf16.mxu0 0
  %1062 = vmatpush1.bf16.msra.mxu0 0
  %1063 = vmatprep.subr.bf16.mxu0 0
  %1064 = vmatpush1.bf16.msra.mxu0 0
  %1065 = vmatprep.subr.bf16.mxu0 0
  %1066 = vmatpush1.bf16.msra.mxu0 0
  %1067 = vmatprep.subr.bf16.mxu0 0
  %1068 = vmatpush1.bf16.msra.mxu0 0
  %1069 = vmatprep.subr.bf16.mxu0 0
  %1070 = vmatpush1.bf16.msra.mxu0 0
  %1071 = vmatprep.subr.bf16.mxu0 0
  %1072 = vmatpush1.bf16.msra.mxu0 0
  %1073 = vmatprep.mubr.bf16.mxu0 0
  %1074 = vmatmul.mubr.bf16.gmra.mrb[0].mxu0 %v102
  %v1075 = vpop.f32.mrb[0].mxu0
  %v1076 = vadd.f32 0.0, %v1075
  %v1077 = vpop.f32.mrb[0].mxu0
  %v1078 = vpop.f32.mrb[0].mxu0
  %v1079 = vadd.f32 0.0, %v1078
  %v1080 = vpop.f32.mrb[0].mxu0
  %1081 = vmatprep.mubr.bf16.mxu0 0
  %1082 = vmatmul.mubr.bf16.gmra.mrb[0].mxu0 %v103
  %v1083 = vpop.f32.mrb[0].mxu0
  %v1084 = vadd.f32 0.0, %v1083
  %v1085 = vpop.f32.mrb[0].mxu0
  %v1086 = vpop.f32.mrb[0].mxu0
  %v1087 = vadd.f32 0.0, %v1086
  %v1088 = vpop.f32.mrb[0].mxu0
  %1089 = vmatprep.mubr.bf16.mxu0 0
  %1090 = vmatmul.mubr.bf16.gmra.mrb[0].mxu0 %v104
  %v1091 = vpop.f32.mrb[0].mxu0
  %v1092 = vadd.f32 0.0, %v1091
  %v1093 = vpop.f32.mrb[0].mxu0
  %v1094 = vpop.f32.mrb[0].mxu0
  %v1095 = vadd.f32 0.0, %v1094
  %v1096 = vpop.f32.mrb[0].mxu0
  %1097 = vmatprep.mubr.bf16.mxu0 0
  %1098 = vmatmul.mubr.bf16.gmra.mrb[0].mxu0 %v105
  %v1099 = vpop.f32.mrb[0].mxu0
  %v1100 = vadd.f32 0.0, %v1099
  %v1101 = vpop.f32.mrb[0].mxu0
  %v1102 = vpop.f32.mrb[0].mxu0
  %v1103 = vadd.f32 0.0, %v1102
  %v1104 = vpop.f32.mrb[0].mxu0
  %1105 = vmatprep.mubr.bf16.mxu0 0
  %1106 = vmatmul.mubr.bf16.gmra.mrb[0].mxu0 %v106
  %v1107 = vpop.f32.mrb[0].mxu0
  %v1108 = vadd.f32 0.0, %v1107
  %v1109 = vpop.f32.mrb[0].mxu0
  %v1110 = vpop.f32.mrb[0].mxu0
  %v1111 = vadd.f32 0.0, %v1110
  %v1112 = vpop.f32.mrb[0].mxu0
  %1113 = vmatprep.mubr.bf16.mxu0 0
  %1114 = vmatmul.mubr.bf16.gmra.mrb[0].mxu0 %v107
  %v1115 = vpop.f32.mrb[0].mxu0
  %v1116 = vadd.f32 0.0, %v1115
  %v1117 = vpop.f32.mrb[0].mxu0
  %v1118 = vpop.f32.mrb[0].mxu0
  %v1119 = vadd.f32 0.0, %v1118
  %v1120 = vpop.f32.mrb[0].mxu0
  %1121 = vmatprep.mubr.bf16.mxu0 0
  %1122 = vmatmul.mubr.bf16.gmra.mrb[0].mxu0 %v108
  %v1123 = vpop.f32.mrb[0].mxu0
  %v1124 = vadd.f32 0.0, %v1123
  %v1125 = vpop.f32.mrb[0].mxu0
  %v1126 = vpop.f32.mrb[0].mxu0
  %v1127 = vadd.f32 0.0, %v1126
  %v1128 = vpop.f32.mrb[0].mxu0
  %1129 = vmatprep.mubr.bf16.mxu0 0
  %1130 = vmatmul.mubr.bf16.gmra.mrb[0].mxu0 %v109
  %v1131 = vpop.f32.mrb[0].mxu0
  %v1132 = vadd.f32 0.0, %v1131
  %v1133 = vpop.f32.mrb[0].mxu0
  %v1134 = vpop.f32.mrb[0].mxu0
  %v1135 = vadd.f32 0.0, %v1134
  %v1136 = vpop.f32.mrb[0].mxu0
  %1137 = vdwg.mxu0
  %v1138 = vpack.c.bf16 %v1079, %v1076
  %v1139 = vpack.c.bf16 %v1087, %v1084
  %v1140 = vpack.c.bf16 %v1095, %v1092
  %v1141 = vpack.c.bf16 %v1103, %v1100
  %v1142 = vpack.c.bf16 %v1111, %v1108
  %v1143 = vpack.c.bf16 %v1119, %v1116
  %v1144 = vpack.c.bf16 %v1127, %v1124
  %v1145 = vpack.c.bf16 %v1135, %v1132
  %v1146 = vld [vmem:[%s8] sm:$0xf]
  %v1147 = vld [vmem:[%s8 + $0x4] sm:$0xf]
  %v1148 = vld [vmem:[%s8 + $0x8] sm:$0xf]
  %v1149 = vld [vmem:[%s8 + $0xc] sm:$0xf]
  %v1150 = vld [vmem:[%s8 + $0x10] sm:$0xf]
  %v1151 = vld [vmem:[%s8 + $0x14] sm:$0xf]
  %v1152 = vld [vmem:[%s8 + $0x18] sm:$0xf]
  %v1153 = vld [vmem:[%s8 + $0x1c] sm:$0xf]
  %v1154 = vld [vmem:[%s8 + $0x20] sm:$0xf]
  %v1155 = vld [vmem:[%s8 + $0x24] sm:$0xf]
  %v1156 = vld [vmem:[%s8 + $0x28] sm:$0xf]
  %v1157 = vld [vmem:[%s8 + $0x2c] sm:$0xf]
  %v1158 = vld [vmem:[%s8 + $0x30] sm:$0xf]
  %v1159 = vld [vmem:[%s8 + $0x34] sm:$0xf]
  %v1160 = vld [vmem:[%s8 + $0x38] sm:$0xf]
  %v1161 = vld [vmem:[%s8 + $0x3c] sm:$0xf]
  %v1162 = vld [vmem:[%s9] sm:$0x1]
  %v1164 = vlaneseq
  %v1165 = vshrl.u32 %v1164, 7
  %v1166 = vsub.s32 0, %v1165
  %v1167 = vrot.slane %v1162, %v1166
  %v1185 = vunpack.c.l.b16 %v1146
  %v1186 = vunpack.c.l.b16 %v1147
  %v1187 = vunpack.c.l.b16 %v1148
  %v1188 = vunpack.c.l.b16 %v1149
  %v1189 = vunpack.c.l.b16 %v1150
  %v1190 = vunpack.c.l.b16 %v1151
  %v1191 = vunpack.c.l.b16 %v1152
  %v1192 = vunpack.c.l.b16 %v1153
  %v1193 = vunpack.c.l.b16 %v1154
  %v1194 = vunpack.c.l.b16 %v1155
  %v1195 = vunpack.c.l.b16 %v1156
  %v1196 = vunpack.c.l.b16 %v1157
  %v1197 = vunpack.c.l.b16 %v1158
  %v1198 = vunpack.c.l.b16 %v1159
  %v1199 = vunpack.c.l.b16 %v1160
  %v1200 = vunpack.c.l.b16 %v1161
  %v1201 = vpack.c.b16 %v1186, %v1185
  %v1202 = vpack.c.b16 %v1188, %v1187
  %v1203 = vpack.c.b16 %v1190, %v1189
  %v1204 = vpack.c.b16 %v1192, %v1191
  %v1205 = vpack.c.b16 %v1194, %v1193
  %v1206 = vpack.c.b16 %v1196, %v1195
  %v1207 = vpack.c.b16 %v1198, %v1197
  %v1208 = vpack.c.b16 %v1200, %v1199
  %1217 = vmatprep.subr.bf16.mxu0 0
  %1218 = vmatpush1.bf16.msra.mxu0 %v1201
  %1219 = vmatprep.subr.bf16.mxu0 0
  %1220 = vmatpush1.bf16.msra.mxu0 %v1202
  %1221 = vmatprep.subr.bf16.mxu0 0
  %1222 = vmatpush1.bf16.msra.mxu0 %v1203
  %1223 = vmatprep.subr.bf16.mxu0 0
  %1224 = vmatpush1.bf16.msra.mxu0 %v1204
  %1225 = vmatprep.subr.bf16.mxu0 0
  %1226 = vmatpush1.bf16.msra.mxu0 %v1205
  %1227 = vmatprep.subr.bf16.mxu0 0
  %1228 = vmatpush1.bf16.msra.mxu0 %v1206
  %1229 = vmatprep.subr.bf16.mxu0 0
  %1230 = vmatpush1.bf16.msra.mxu0 %v1207
  %1231 = vmatprep.subr.bf16.mxu0 0
  %1232 = vmatpush1.bf16.msra.mxu0 %v1208
  %1233 = vmatprep.subr.bf16.mxu0 0
  %1234 = vmatpush1.bf16.msra.mxu0 0
  %1235 = vmatprep.subr.bf16.mxu0 0
  %1236 = vmatpush1.bf16.msra.mxu0 0
  %1237 = vmatprep.subr.bf16.mxu0 0
  %1238 = vmatpush1.bf16.msra.mxu0 0
  %1239 = vmatprep.subr.bf16.mxu0 0
  %1240 = vmatpush1.bf16.msra.mxu0 0
  %1241 = vmatprep.subr.bf16.mxu0 0
  %1242 = vmatpush1.bf16.msra.mxu0 0
  %1243 = vmatprep.subr.bf16.mxu0 0
  %1244 = vmatpush1.bf16.msra.mxu0 0
  %1245 = vmatprep.subr.bf16.mxu0 0
  %1246 = vmatpush1.bf16.msra.mxu0 0
  %1247 = vmatprep.subr.bf16.mxu0 0
  %1248 = vmatpush1.bf16.msra.mxu0 0
  %1249 = vmatprep.mubr.bf16.mxu0 0
  %1250 = vmatmul.mubr.bf16.gmra.mrb[0].mxu0 %v1138
  %v1251 = vpop.f32.mrb[0].mxu0
  %v1252 = vadd.f32 %v1167, %v1251
  %v1253 = vpop.f32.mrb[0].mxu0
  %v1254 = vpop.f32.mrb[0].mxu0
  %v1255 = vadd.f32 %v1167, %v1254
  %v1256 = vpop.f32.mrb[0].mxu0
  %1257 = vmatprep.mubr.bf16.mxu0 0
  %1258 = vmatmul.mubr.bf16.gmra.mrb[0].mxu0 %v1139
  %v1259 = vpop.f32.mrb[0].mxu0
  %v1260 = vadd.f32 %v1167, %v1259
  %v1261 = vpop.f32.mrb[0].mxu0
  %v1262 = vpop.f32.mrb[0].mxu0
  %v1263 = vadd.f32 %v1167, %v1262
  %v1264 = vpop.f32.mrb[0].mxu0
  %1265 = vmatprep.mubr.bf16.mxu0 0
  %1266 = vmatmul.mubr.bf16.gmra.mrb[0].mxu0 %v1140
  %v1267 = vpop.f32.mrb[0].mxu0
  %v1268 = vadd.f32 %v1167, %v1267
  %v1269 = vpop.f32.mrb[0].mxu0
  %v1270 = vpop.f32.mrb[0].mxu0
  %v1271 = vadd.f32 %v1167, %v1270
  %v1272 = vpop.f32.mrb[0].mxu0
  %1273 = vmatprep.mubr.bf16.mxu0 0
  %1274 = vmatmul.mubr.bf16.gmra.mrb[0].mxu0 %v1141
  %v1275 = vpop.f32.mrb[0].mxu0
  %v1276 = vadd.f32 %v1167, %v1275
  %v1277 = vpop.f32.mrb[0].mxu0
  %v1278 = vpop.f32.mrb[0].mxu0
  %v1279 = vadd.f32 %v1167, %v1278
  %v1280 = vpop.f32.mrb[0].mxu0
  %1281 = vmatprep.mubr.bf16.mxu0 0
  %1282 = vmatmul.mubr.bf16.gmra.mrb[0].mxu0 %v1142
  %v1283 = vpop.f32.mrb[0].mxu0
  %v1284 = vadd.f32 %v1167, %v1283
  %v1285 = vpop.f32.mrb[0].mxu0
  %v1286 = vpop.f32.mrb[0].mxu0
  %v1287 = vadd.f32 %v1167, %v1286
  %v1288 = vpop.f32.mrb[0].mxu0
  %1289 = vmatprep.mubr.bf16.mxu0 0
  %1290 = vmatmul.mubr.bf16.gmra.mrb[0].mxu0 %v1143
  %v1291 = vpop.f32.mrb[0].mxu0
  %v1292 = vadd.f32 %v1167, %v1291
  %v1293 = vpop.f32.mrb[0].mxu0
  %v1294 = vpop.f32.mrb[0].mxu0
  %v1295 = vadd.f32 %v1167, %v1294
  %v1296 = vpop.f32.mrb[0].mxu0
  %1297 = vmatprep.mubr.bf16.mxu0 0
  %1298 = vmatmul.mubr.bf16.gmra.mrb[0].mxu0 %v1144
  %v1299 = vpop.f32.mrb[0].mxu0
  %v1300 = vadd.f32 %v1167, %v1299
  %v1301 = vpop.f32.mrb[0].mxu0
  %v1302 = vpop.f32.mrb[0].mxu0
  %v1303 = vadd.f32 %v1167, %v1302
  %v1304 = vpop.f32.mrb[0].mxu0
  %1305 = vmatprep.mubr.bf16.mxu0 0
  %1306 = vmatmul.mubr.bf16.gmra.mrb[0].mxu0 %v1145
  %v1307 = vpop.f32.mrb[0].mxu0
  %v1308 = vadd.f32 %v1167, %v1307
  %v1309 = vpop.f32.mrb[0].mxu0
  %v1310 = vpop.f32.mrb[0].mxu0
  %v1311 = vadd.f32 %v1167, %v1310
  %v1312 = vpop.f32.mrb[0].mxu0
  %1313 = vdwg.mxu0
  %1314 = vst [vmem:[%s11] sm:$0xff] %v674
  %1315 = vst [vmem:[%s11 + $0x8] sm:$0xff] %v677
  %1316 = vst [vmem:[%s11 + $0x10] sm:$0xff] %v682
  %1317 = vst [vmem:[%s11 + $0x18] sm:$0xff] %v685
  %1318 = vst [vmem:[%s11 + $0x20] sm:$0xff] %v690
  %1319 = vst [vmem:[%s11 + $0x28] sm:$0xff] %v693
  %1320 = vst [vmem:[%s11 + $0x30] sm:$0xff] %v698
  %1321 = vst [vmem:[%s11 + $0x38] sm:$0xff] %v701
  %1322 = vst [vmem:[%s11 + $0x40] sm:$0xff] %v706
  %1323 = vst [vmem:[%s11 + $0x48] sm:$0xff] %v709
  %1324 = vst [vmem:[%s11 + $0x50] sm:$0xff] %v714
  %1325 = vst [vmem:[%s11 + $0x58] sm:$0xff] %v717
  %1326 = vst [vmem:[%s11 + $0x60] sm:$0xff] %v722
  %1327 = vst [vmem:[%s11 + $0x68] sm:$0xff] %v725
  %1328 = vst [vmem:[%s11 + $0x70] sm:$0xff] %v730
  %1329 = vst [vmem:[%s11 + $0x78] sm:$0xff] %v733
  %1330 = vst [vmem:[%s10] sm:$0xff] %v1252
  %1331 = vst [vmem:[%s10 + $0x8] sm:$0xff] %v1255
  %1332 = vst [vmem:[%s10 + $0x10] sm:$0xff] %v1260
  %1333 = vst [vmem:[%s10 + $0x18] sm:$0xff] %v1263
  %1334 = vst [vmem:[%s10 + $0x20] sm:$0xff] %v1268
  %1335 = vst [vmem:[%s10 + $0x28] sm:$0xff] %v1271
  %1336 = vst [vmem:[%s10 + $0x30] sm:$0xff] %v1276
  %1337 = vst [vmem:[%s10 + $0x38] sm:$0xff] %v1279
  %1338 = vst [vmem:[%s10 + $0x40] sm:$0xff] %v1284
  %1339 = vst [vmem:[%s10 + $0x48] sm:$0xff] %v1287
  %1340 = vst [vmem:[%s10 + $0x50] sm:$0xff] %v1292
  %1341 = vst [vmem:[%s10 + $0x58] sm:$0xff] %v1295
  %1342 = vst [vmem:[%s10 + $0x60] sm:$0xff] %v1300
  %1343 = vst [vmem:[%s10 + $0x68] sm:$0xff] %v1303
  %1344 = vst [vmem:[%s10 + $0x70] sm:$0xff] %v1308
  %1345 = vst [vmem:[%s10 + $0x78] sm:$0xff] %v1311
  // Predicated region
  $region42: #{gnn_autoencoder_forward.1} parent=0 // pred_check
    _
  $region43: #{gnn_autoencoder_forward.1} parent=0 // pred_check_branch
    %1347 = sbr.rel (0) target = $region45
  $region44: #{gnn_autoencoder_forward.1} parent=0 // pred_region
    _
  $region45: #{gnn_autoencoder_forward.1} parent=0 // pred_fallthru
    _
  // Predicated region
  $region46: #{gnn_autoencoder_forward.1} parent=0 // pred_check
    _
  $region47: #{gnn_autoencoder_forward.1} parent=0 // pred_check_branch
    %1349 = sbr.rel (0) target = $region49
  $region48: #{gnn_autoencoder_forward.1} parent=0 // pred_region
    _
  $region49: #{gnn_autoencoder_forward.1} parent=0 // pred_fallthru
    _
  // Predicated region
  $region50: #{gnn_autoencoder_forward.1} parent=0 // pred_check
    _
  $region51: #{gnn_autoencoder_forward.1} parent=0 // pred_check_branch
    %1351 = sbr.rel (0) target = $region53
  $region52: #{gnn_autoencoder_forward.1} parent=0 // pred_region
    _
  $region53: #{gnn_autoencoder_forward.1} parent=0 // pred_fallthru
    _
  // Predicated region
  $region54: #{gnn_autoencoder_forward.1} parent=0 // pred_check
    _
  $region55: #{gnn_autoencoder_forward.1} parent=0 // pred_check_branch
    %1353 = sbr.rel (0) target = $region57
  $region56: #{gnn_autoencoder_forward.1} parent=0 // pred_region
    _
  $region57: #{gnn_autoencoder_forward.1} parent=0 // pred_fallthru
    _

</llo_original>
